<compile_context>
chip_gen: v6e
topology: v6e:2x2x1
jax: 0.10.0
libtpu: 0.0.40
codegen_flags: <defaults>
</compile_context>

<pallas_src>
import functools

import jax
import jax.numpy as jnp
from jax.experimental import pallas as pl
from jax.experimental.pallas import tpu as pltpu


def _decoder_v2_kernel(BB, P, L2,
                       x_ref, wsel_ref,
                       ws0_ref, bs0_ref, ws1_ref, bs1_ref, ws2_ref, bs2_ref,
                       wp1_ref, bp1_ref, wp2_ref, bp2_ref, wp3_ref, bp3_ref,
                       wp4_ref, bp4_ref,
                       wc1_ref, bc1_ref, wc2_ref, bc2_ref, wc3_ref, bc3_ref,
                       d_ref, cls_ref):
    f32 = jnp.float32

    def linear(a, w_ref, b_ref, relu=True):
        w = w_ref[...]
        # Cast activations to the weight dtype (bf16 for the big layers, f32
        # for the merged 13-wide tail layer); accumulate in f32 on the MXU.
        y = jnp.dot(a.astype(w.dtype), w, preferred_element_type=f32) + b_ref[...]
        return jnp.maximum(y, 0.0) if relu else y

    # ---- stack_layers: Linear(L,h0)+ReLU, Linear(h0,h1)+ReLU, Linear(h1,2L)+ReLU
    s = linear(x_ref[...], ws0_ref, bs0_ref)
    s = linear(s, ws1_ref, bs1_ref)
    s = linear(s, ws2_ref, bs2_ref)                                 # (BB, 2L) f32

    # ---- FSPool.forward_transpose (FSUnpool) ------------------------------
    # wsel[b, i, c] was precomputed in the wrapper; row order (b, i) -> b*P+i
    # matches the particle loop of the reference / the output BlockSpec.
    u = (s[:, None, :] * wsel_ref[...]).reshape(BB * P, L2)         # (BB*P, 2L)

    # ---- particle_decoder: batched over all BB*P particles at once ---------
    h = linear(u, wp1_ref, bp1_ref)
    h = linear(h, wp2_ref, bp2_ref)
    h = linear(h, wp3_ref, bp3_ref)
    # merged last Linear(256,13); f32 weights keep the kinematics accurate.
    d = linear(h, wp4_ref, bp4_ref, relu=False)                     # (BB*P, 13)
    d_ref[...] = d                                                  # kine = d[:, :4] (wrapper)

    # ---- stack_layer2 classification head + LogSoftmax(dim=2) --------------
    # Wc1 is zero-padded to (13, 256) (rows 0-3 zero), so the whole d can be
    # consumed with no in-kernel lane slicing: d @ Wc1_pad == d[:, 4:] @ Wc1.
    c = linear(d, wc1_ref, bc1_ref)
    c = linear(c, wc2_ref, bc2_ref)
    c = linear(c, wc3_ref, bc3_ref, relu=False)                     # (BB*P, 9)
    z = c - jnp.max(c, axis=-1, keepdims=True)
    cls_ref[...] = z - jnp.log(jnp.sum(jnp.exp(z), axis=-1, keepdims=True))


def _full_spec(shape):
    nd = len(shape)
    return pl.BlockSpec(shape, lambda g, nd=nd: (0,) * nd)


def _fspool_position_weights(fsw, set_size, n_pieces):
    """Piecewise-linear FSPool weight evaluated at the static sorted positions.

    fsw: (channels, n_pieces+1).  Returns (channels, set_size)."""
    pos = jnp.minimum(
        jnp.arange(set_size, dtype=jnp.float32) / max(set_size - 1, 1), 1.0)
    idx_f = n_pieces * pos
    idx = jnp.floor(idx_f).astype(jnp.int32)
    frac = idx_f - idx.astype(jnp.float32)
    idx_r = jnp.minimum(idx + 1, n_pieces)
    return (1.0 - frac)[None, :] * fsw[:, idx] + frac[None, :] * fsw[:, idx_r]


def _batch_block(B):
    # Biggest batch block (amortizes per-grid-step overhead, keeps the MXU on
    # long M runs) while still leaving >= 2 grid steps when the batch allows,
    # so the "parallel" batch axis can shard across v7x's two TensorCores.
    for cand in (256, 128, 64, 32, 16, 8):
        if B % cand == 0 and B // cand >= 2:
            return cand
    return B


def decoder_v2_forward(x, perm, params, *, P):
    """Pallas implementation of Decoder_v2.forward -> (kine_pred, class_pred)."""
    B, L = x.shape
    L2 = 2 * L
    assert perm.shape == (B, L2, P)

    # ------------- glue: parameter / input layout preprocessing -------------
    # FSPool piecewise-linear weights at the static sorted positions, gathered
    # into destination-particle order once (tiny XLA gather, independent of x):
    #   wsel[b, i, c] = wf[c, inv_perm[b, c, i]]  where  perm[b, c, inv] == i
    wf = _fspool_position_weights(params["fsw"], P, P)              # (2L, P)
    inv_perm = jnp.argsort(perm.astype(jnp.int32), axis=2)          # (B, 2L, P)
    wsel = jnp.take_along_axis(
        jnp.broadcast_to(wf[None], (B, L2, P)), inv_perm, axis=2)   # (B, 2L, P)
    wsel = jnp.transpose(wsel, (0, 2, 1)).astype(jnp.float32)       # (B, P, 2L)

    bf16 = jnp.bfloat16
    wc1_pad = jnp.concatenate(                                      # (13, 256), rows 0-3 zero
        [jnp.zeros((4,) + params["Wc1"].shape[1:], params["Wc1"].dtype),
         params["Wc1"]], axis=0)

    weights = [params["Ws0"].astype(bf16), params["bs0"],
               params["Ws1"].astype(bf16), params["bs1"],
               params["Ws2"].astype(bf16), params["bs2"],
               params["Wp1"].astype(bf16), params["bp1"],
               params["Wp2"].astype(bf16), params["bp2"],
               params["Wp3"].astype(bf16), params["bp3"],
               params["Wp4"], params["bp4"],                        # f32 tail (cheap, accurate kine)
               wc1_pad.astype(bf16), params["bc1"],
               params["Wc2"].astype(bf16), params["bc2"],
               params["Wc3"].astype(bf16), params["bc3"]]

    BB = _batch_block(B)
    grid = (B // BB,)

    in_specs = ([pl.BlockSpec((BB, L), lambda g: (g, 0)),
                 pl.BlockSpec((BB, P, L2), lambda g: (g, 0, 0))]
                + [_full_spec(w.shape) for w in weights])

    out_shape = (jax.ShapeDtypeStruct((B * P, 13), jnp.float32),
                 jax.ShapeDtypeStruct((B * P, 9), jnp.float32))
    out_specs = (pl.BlockSpec((BB * P, 13), lambda g: (g, 0)),
                 pl.BlockSpec((BB * P, 9), lambda g: (g, 0)))

    kernel = functools.partial(_decoder_v2_kernel, BB, P, L2)
    d_flat, cls_flat = pl.pallas_call(
        kernel,
        out_shape=out_shape,
        grid=grid,
        in_specs=in_specs,
        out_specs=out_specs,
        compiler_params=pltpu.CompilerParams(
            dimension_semantics=("parallel",),
            vmem_limit_bytes=32 * 1024 * 1024),
    )(x, wsel, *weights)

    kine = d_flat[:, :4].reshape(B, P, 4)
    return kine, cls_flat.reshape(B, P, 9)


def reference_forward(x, perm, params, *, P):
    """Pure-JAX reference mirroring the PyTorch Decoder_v2 semantics."""
    relu = jax.nn.relu
    p = params

    s = relu(jnp.dot(x, p["Ws0"]) + p["bs0"])
    s = relu(jnp.dot(s, p["Ws1"]) + p["bs1"])
    s = relu(jnp.dot(s, p["Ws2"]) + p["bs2"])                   # (B, 2L)

    # FSPool.forward_transpose: weight * x, then scatter along the set dim.
    wf = _fspool_position_weights(p["fsw"], P, P)               # (2L, P)
    y = s[:, :, None] * wf[None, :, :]                          # (B, 2L, P)
    onehot = jax.nn.one_hot(perm, P, dtype=y.dtype)             # (B, 2L, Pj, Pi)
    unpooled = jnp.einsum("bcj,bcji->bci", y, onehot)           # == scatter(2, perm, y)

    kin_all, cls_all = [], []
    for i in range(P):
        xi = unpooled[:, :, i]
        h = relu(jnp.dot(xi, p["Wp1"]) + p["bp1"])
        h = relu(jnp.dot(h, p["Wp2"]) + p["bp2"])
        h = relu(jnp.dot(h, p["Wp3"]) + p["bp3"])
        d = jnp.dot(h, p["Wp4"]) + p["bp4"]                     # (B, 13)
        kin_all.append(d[:, None, :4])
        c = relu(jnp.dot(d[:, 4:], p["Wc1"]) + p["bc1"])
        c = relu(jnp.dot(c, p["Wc2"]) + p["bc2"])
        c = jnp.dot(c, p["Wc3"]) + p["bc3"]
        cls_all.append(c[:, None, :])
    kine = jnp.concatenate(kin_all, axis=1)                     # (B, P, 4)
    cls = jax.nn.log_softmax(jnp.concatenate(cls_all, axis=1), axis=2)
    return kine, cls


if __name__ == "__main__":
    # Decoder_v2(num_particles=P, num_inputs=L, 32, 64, activ='ReLU')
    B, P, L = 2, 8, 16          # batch, num_particles, latent (num_inputs)
    H0, H1 = 32, 64             # *num_hidden of the stack MLP
    L2 = 2 * L

    key = jax.random.PRNGKey(0)
    ks = jax.random.split(key, 24)
    nrm = lambda k, shp, s=0.1: (s * jax.random.normal(k, shp)).astype(jnp.float32)

    params = dict(
        # stack_layers: Linear(L,32)+ReLU, Linear(32,64)+ReLU, Linear(64,2L)+ReLU
        Ws0=nrm(ks[0], (L, H0)),    bs0=nrm(ks[1], (1, H0)),
        Ws1=nrm(ks[2], (H0, H1)),   bs1=nrm(ks[3], (1, H1)),
        Ws2=nrm(ks[4], (H1, L2)),   bs2=nrm(ks[5], (1, L2)),
        # FSPool(latent*2, num_particles) weight: (2L, P+1)
        fsw=nrm(ks[6], (L2, P + 1), 0.5),
        # particle_decoder: Linear(2L,256),ReLU x3, Linear(256,13)
        Wp1=nrm(ks[7], (L2, 256)),  bp1=nrm(ks[8], (1, 256)),
        Wp2=nrm(ks[9], (256, 256)), bp2=nrm(ks[10], (1, 256)),
        Wp3=nrm(ks[11], (256, 256)), bp3=nrm(ks[12], (1, 256)),
        Wp4=nrm(ks[13], (256, 13)), bp4=nrm(ks[14], (1, 13)),
        # stack_layer2: Linear(9,256)+ReLU, Linear(256,256)+ReLU, Linear(256,9)
        Wc1=nrm(ks[15], (9, 256)),  bc1=nrm(ks[16], (1, 256)),
        Wc2=nrm(ks[17], (256, 256)), bc2=nrm(ks[18], (1, 256)),
        Wc3=nrm(ks[19], (256, 9)),  bc3=nrm(ks[20], (1, 9)),
    )
    x = jax.random.normal(ks[21], (B, L), dtype=jnp.float32)
    # Sort permutation per (batch, channel), as produced by the encoder FSPool:
    perm = jnp.argsort(-jax.random.uniform(ks[22], (B, L2, P)), axis=2).astype(jnp.int32)

    kine, cls = decoder_v2_forward(x, perm, params, P=P)
    kine, cls = jax.block_until_ready((kine, cls))

    kine_r, cls_r = reference_forward(x, perm, params, P=P)
    assert kine.shape == (B, P, 4) and cls.shape == (B, P, 9)
    # bf16 MXU operands (f32 accumulate) -> ~1e-2..2e-2 agreement expected.
    for name, o, r in (("kine_pred", kine, kine_r), ("class_pred", cls, cls_r)):
        if not jnp.allclose(o, r, rtol=2e-2, atol=2e-2):
            raise AssertionError(
                f"{name} mismatch: max abs diff {float(jnp.max(jnp.abs(o - r)))}")
    print("KERNEL_OK")
</pallas_src>

<mosaic_0001>
module attributes {stable_mosaic.version = 11 : i64} {
  func.func @_decoder_v2_kernel(%arg0: i32, %arg1: memref<2x16xf32, #tpu.memory_space<vmem>>, %arg2: memref<2x8x32xf32, #tpu.memory_space<vmem>>, %arg3: memref<16x32xbf16, #tpu.memory_space<vmem>>, %arg4: memref<1x32xf32, #tpu.memory_space<vmem>>, %arg5: memref<32x64xbf16, #tpu.memory_space<vmem>>, %arg6: memref<1x64xf32, #tpu.memory_space<vmem>>, %arg7: memref<64x32xbf16, #tpu.memory_space<vmem>>, %arg8: memref<1x32xf32, #tpu.memory_space<vmem>>, %arg9: memref<32x256xbf16, #tpu.memory_space<vmem>>, %arg10: memref<1x256xf32, #tpu.memory_space<vmem>>, %arg11: memref<256x256xbf16, #tpu.memory_space<vmem>>, %arg12: memref<1x256xf32, #tpu.memory_space<vmem>>, %arg13: memref<256x256xbf16, #tpu.memory_space<vmem>>, %arg14: memref<1x256xf32, #tpu.memory_space<vmem>>, %arg15: memref<256x13xf32, #tpu.memory_space<vmem>>, %arg16: memref<1x13xf32, #tpu.memory_space<vmem>>, %arg17: memref<13x256xbf16, #tpu.memory_space<vmem>>, %arg18: memref<1x256xf32, #tpu.memory_space<vmem>>, %arg19: memref<256x256xbf16, #tpu.memory_space<vmem>>, %arg20: memref<1x256xf32, #tpu.memory_space<vmem>>, %arg21: memref<256x9xbf16, #tpu.memory_space<vmem>>, %arg22: memref<1x9xf32, #tpu.memory_space<vmem>>, %arg23: memref<16x13xf32, #tpu.memory_space<vmem>>, %arg24: memref<16x9xf32, #tpu.memory_space<vmem>>) attributes {dimension_semantics = [#tpu.dimension_semantics<parallel>], iteration_bounds = array<i64: 1>, scalar_prefetch = 0 : i64, scratch_operands = 0 : i64, tpu.core_type = #tpu.core_type<tc>, window_params = [{transform_indices = @transform_0, window_bounds = array<i64: 2, 16>}, {transform_indices = @transform_1, window_bounds = array<i64: 2, 8, 32>}, {pipeline_mode = #tpu.pipeline_mode<synchronous>, transform_indices = @transform_2, window_bounds = array<i64: 16, 32>}, {pipeline_mode = #tpu.pipeline_mode<synchronous>, transform_indices = @transform_3, window_bounds = array<i64: 1, 32>}, {pipeline_mode = #tpu.pipeline_mode<synchronous>, transform_indices = @transform_4, window_bounds = array<i64: 32, 64>}, {pipeline_mode = #tpu.pipeline_mode<synchronous>, transform_indices = @transform_5, window_bounds = array<i64: 1, 64>}, {pipeline_mode = #tpu.pipeline_mode<synchronous>, transform_indices = @transform_6, window_bounds = array<i64: 64, 32>}, {pipeline_mode = #tpu.pipeline_mode<synchronous>, transform_indices = @transform_7, window_bounds = array<i64: 1, 32>}, {pipeline_mode = #tpu.pipeline_mode<synchronous>, transform_indices = @transform_8, window_bounds = array<i64: 32, 256>}, {pipeline_mode = #tpu.pipeline_mode<synchronous>, transform_indices = @transform_9, window_bounds = array<i64: 1, 256>}, {pipeline_mode = #tpu.pipeline_mode<synchronous>, transform_indices = @transform_10, window_bounds = array<i64: 256, 256>}, {pipeline_mode = #tpu.pipeline_mode<synchronous>, transform_indices = @transform_11, window_bounds = array<i64: 1, 256>}, {pipeline_mode = #tpu.pipeline_mode<synchronous>, transform_indices = @transform_12, window_bounds = array<i64: 256, 256>}, {pipeline_mode = #tpu.pipeline_mode<synchronous>, transform_indices = @transform_13, window_bounds = array<i64: 1, 256>}, {pipeline_mode = #tpu.pipeline_mode<synchronous>, transform_indices = @transform_14, window_bounds = array<i64: 256, 13>}, {pipeline_mode = #tpu.pipeline_mode<synchronous>, transform_indices = @transform_15, window_bounds = array<i64: 1, 13>}, {pipeline_mode = #tpu.pipeline_mode<synchronous>, transform_indices = @transform_16, window_bounds = array<i64: 13, 256>}, {pipeline_mode = #tpu.pipeline_mode<synchronous>, transform_indices = @transform_17, window_bounds = array<i64: 1, 256>}, {pipeline_mode = #tpu.pipeline_mode<synchronous>, transform_indices = @transform_18, window_bounds = array<i64: 256, 256>}, {pipeline_mode = #tpu.pipeline_mode<synchronous>, transform_indices = @transform_19, window_bounds = array<i64: 1, 256>}, {pipeline_mode = #tpu.pipeline_mode<synchronous>, transform_indices = @transform_20, window_bounds = array<i64: 256, 9>}, {pipeline_mode = #tpu.pipeline_mode<synchronous>, transform_indices = @transform_21, window_bounds = array<i64: 1, 9>}, {transform_indices = @transform_22, window_bounds = array<i64: 16, 13>}, {transform_indices = @transform_23, window_bounds = array<i64: 16, 9>}]} {
    %c0 = arith.constant 0 : index
    %c0_0 = arith.constant 0 : index
    %0 = vector.load %arg1[%c0, %c0_0] : memref<2x16xf32, #tpu.memory_space<vmem>>, vector<2x16xf32>
    %c0_1 = arith.constant 0 : index
    %c0_2 = arith.constant 0 : index
    %1 = vector.load %arg3[%c0_1, %c0_2] : memref<16x32xbf16, #tpu.memory_space<vmem>>, vector<16x32xbf16>
    %2 = arith.truncf %0 : vector<2x16xf32> to vector<2x16xbf16>
    %cst = arith.constant dense<0.000000e+00> : vector<2x32xf32>
    %3 = tpu.matmul %2, %1, %cst {dimension_numbers = #tpu.dot_dimension_numbers<[1], [0], [0], [1], [0, 0, 1, 1], [], []>} : vector<2x16xbf16>, vector<16x32xbf16>, vector<2x32xf32> -> vector<2x32xf32>
    %c0_3 = arith.constant 0 : index
    %c0_4 = arith.constant 0 : index
    %4 = vector.load %arg4[%c0_3, %c0_4] : memref<1x32xf32, #tpu.memory_space<vmem>>, vector<1x32xf32>
    %5 = vector.broadcast %4 : vector<1x32xf32> to vector<2x32xf32>
    %6 = arith.addf %3, %5 : vector<2x32xf32>
    %cst_5 = arith.constant 0.000000e+00 : f32
    %7 = vector.broadcast %cst_5 : f32 to vector<2x32xf32>
    %8 = arith.maximumf %6, %7 : vector<2x32xf32>
    %c0_6 = arith.constant 0 : index
    %c0_7 = arith.constant 0 : index
    %9 = vector.load %arg5[%c0_6, %c0_7] : memref<32x64xbf16, #tpu.memory_space<vmem>>, vector<32x64xbf16>
    %10 = arith.truncf %8 : vector<2x32xf32> to vector<2x32xbf16>
    %cst_8 = arith.constant dense<0.000000e+00> : vector<2x64xf32>
    %11 = tpu.matmul %10, %9, %cst_8 {dimension_numbers = #tpu.dot_dimension_numbers<[1], [0], [0], [1], [0, 0, 1, 1], [], []>} : vector<2x32xbf16>, vector<32x64xbf16>, vector<2x64xf32> -> vector<2x64xf32>
    %c0_9 = arith.constant 0 : index
    %c0_10 = arith.constant 0 : index
    %12 = vector.load %arg6[%c0_9, %c0_10] : memref<1x64xf32, #tpu.memory_space<vmem>>, vector<1x64xf32>
    %13 = vector.broadcast %12 : vector<1x64xf32> to vector<2x64xf32>
    %14 = arith.addf %11, %13 : vector<2x64xf32>
    %cst_11 = arith.constant 0.000000e+00 : f32
    %15 = vector.broadcast %cst_11 : f32 to vector<2x64xf32>
    %16 = arith.maximumf %14, %15 : vector<2x64xf32>
    %c0_12 = arith.constant 0 : index
    %c0_13 = arith.constant 0 : index
    %17 = vector.load %arg7[%c0_12, %c0_13] : memref<64x32xbf16, #tpu.memory_space<vmem>>, vector<64x32xbf16>
    %18 = arith.truncf %16 : vector<2x64xf32> to vector<2x64xbf16>
    %cst_14 = arith.constant dense<0.000000e+00> : vector<2x32xf32>
    %19 = tpu.matmul %18, %17, %cst_14 {dimension_numbers = #tpu.dot_dimension_numbers<[1], [0], [0], [1], [0, 0, 1, 1], [], []>} : vector<2x64xbf16>, vector<64x32xbf16>, vector<2x32xf32> -> vector<2x32xf32>
    %c0_15 = arith.constant 0 : index
    %c0_16 = arith.constant 0 : index
    %20 = vector.load %arg8[%c0_15, %c0_16] : memref<1x32xf32, #tpu.memory_space<vmem>>, vector<1x32xf32>
    %21 = vector.broadcast %20 : vector<1x32xf32> to vector<2x32xf32>
    %22 = arith.addf %19, %21 : vector<2x32xf32>
    %cst_17 = arith.constant 0.000000e+00 : f32
    %23 = vector.broadcast %cst_17 : f32 to vector<2x32xf32>
    %24 = arith.maximumf %22, %23 : vector<2x32xf32>
    %25 = vector.shape_cast %24 : vector<2x32xf32> to vector<2x1x32xf32>
    %c0_18 = arith.constant 0 : index
    %c0_19 = arith.constant 0 : index
    %c0_20 = arith.constant 0 : index
    %26 = vector.load %arg2[%c0_18, %c0_19, %c0_20] : memref<2x8x32xf32, #tpu.memory_space<vmem>>, vector<2x8x32xf32>
    %27 = vector.broadcast %25 : vector<2x1x32xf32> to vector<2x8x32xf32>
    %28 = arith.mulf %27, %26 : vector<2x8x32xf32>
    %29 = vector.shape_cast %28 : vector<2x8x32xf32> to vector<16x32xf32>
    %c0_21 = arith.constant 0 : index
    %c0_22 = arith.constant 0 : index
    %30 = vector.load %arg9[%c0_21, %c0_22] : memref<32x256xbf16, #tpu.memory_space<vmem>>, vector<32x256xbf16>
    %31 = arith.truncf %29 : vector<16x32xf32> to vector<16x32xbf16>
    %cst_23 = arith.constant dense<0.000000e+00> : vector<16x256xf32>
    %32 = tpu.matmul %31, %30, %cst_23 {dimension_numbers = #tpu.dot_dimension_numbers<[1], [0], [0], [1], [0, 0, 1, 1], [], []>} : vector<16x32xbf16>, vector<32x256xbf16>, vector<16x256xf32> -> vector<16x256xf32>
    %c0_24 = arith.constant 0 : index
    %c0_25 = arith.constant 0 : index
    %33 = vector.load %arg10[%c0_24, %c0_25] : memref<1x256xf32, #tpu.memory_space<vmem>>, vector<1x256xf32>
    %34 = vector.broadcast %33 : vector<1x256xf32> to vector<16x256xf32>
    %35 = arith.addf %32, %34 : vector<16x256xf32>
    %cst_26 = arith.constant 0.000000e+00 : f32
    %36 = vector.broadcast %cst_26 : f32 to vector<16x256xf32>
    %37 = arith.maximumf %35, %36 : vector<16x256xf32>
    %c0_27 = arith.constant 0 : index
    %c0_28 = arith.constant 0 : index
    %38 = vector.load %arg11[%c0_27, %c0_28] : memref<256x256xbf16, #tpu.memory_space<vmem>>, vector<256x256xbf16>
    %39 = arith.truncf %37 : vector<16x256xf32> to vector<16x256xbf16>
    %cst_29 = arith.constant dense<0.000000e+00> : vector<16x256xf32>
    %40 = tpu.matmul %39, %38, %cst_29 {dimension_numbers = #tpu.dot_dimension_numbers<[1], [0], [0], [1], [0, 0, 1, 1], [], []>} : vector<16x256xbf16>, vector<256x256xbf16>, vector<16x256xf32> -> vector<16x256xf32>
    %c0_30 = arith.constant 0 : index
    %c0_31 = arith.constant 0 : index
    %41 = vector.load %arg12[%c0_30, %c0_31] : memref<1x256xf32, #tpu.memory_space<vmem>>, vector<1x256xf32>
    %42 = vector.broadcast %41 : vector<1x256xf32> to vector<16x256xf32>
    %43 = arith.addf %40, %42 : vector<16x256xf32>
    %cst_32 = arith.constant 0.000000e+00 : f32
    %44 = vector.broadcast %cst_32 : f32 to vector<16x256xf32>
    %45 = arith.maximumf %43, %44 : vector<16x256xf32>
    %c0_33 = arith.constant 0 : index
    %c0_34 = arith.constant 0 : index
    %46 = vector.load %arg13[%c0_33, %c0_34] : memref<256x256xbf16, #tpu.memory_space<vmem>>, vector<256x256xbf16>
    %47 = arith.truncf %45 : vector<16x256xf32> to vector<16x256xbf16>
    %cst_35 = arith.constant dense<0.000000e+00> : vector<16x256xf32>
    %48 = tpu.matmul %47, %46, %cst_35 {dimension_numbers = #tpu.dot_dimension_numbers<[1], [0], [0], [1], [0, 0, 1, 1], [], []>} : vector<16x256xbf16>, vector<256x256xbf16>, vector<16x256xf32> -> vector<16x256xf32>
    %c0_36 = arith.constant 0 : index
    %c0_37 = arith.constant 0 : index
    %49 = vector.load %arg14[%c0_36, %c0_37] : memref<1x256xf32, #tpu.memory_space<vmem>>, vector<1x256xf32>
    %50 = vector.broadcast %49 : vector<1x256xf32> to vector<16x256xf32>
    %51 = arith.addf %48, %50 : vector<16x256xf32>
    %cst_38 = arith.constant 0.000000e+00 : f32
    %52 = vector.broadcast %cst_38 : f32 to vector<16x256xf32>
    %53 = arith.maximumf %51, %52 : vector<16x256xf32>
    %c0_39 = arith.constant 0 : index
    %c0_40 = arith.constant 0 : index
    %54 = vector.load %arg15[%c0_39, %c0_40] : memref<256x13xf32, #tpu.memory_space<vmem>>, vector<256x13xf32>
    %cst_41 = arith.constant dense<0.000000e+00> : vector<16x13xf32>
    %55 = tpu.matmul %53, %54, %cst_41 {dimension_numbers = #tpu.dot_dimension_numbers<[1], [0], [0], [1], [0, 0, 1, 1], [], []>} : vector<16x256xf32>, vector<256x13xf32>, vector<16x13xf32> -> vector<16x13xf32>
    %c0_42 = arith.constant 0 : index
    %c0_43 = arith.constant 0 : index
    %56 = vector.load %arg16[%c0_42, %c0_43] : memref<1x13xf32, #tpu.memory_space<vmem>>, vector<1x13xf32>
    %57 = vector.broadcast %56 : vector<1x13xf32> to vector<16x13xf32>
    %58 = arith.addf %55, %57 : vector<16x13xf32>
    %c0_44 = arith.constant 0 : index
    %c0_45 = arith.constant 0 : index
    %59 = vector.load %arg23[%c0_44, %c0_45] : memref<16x13xf32, #tpu.memory_space<vmem>>, vector<16x13xf32>
    tpu.vector_store %arg23[%c0_44, %c0_45], %58 {strides = array<i32>} : memref<16x13xf32, #tpu.memory_space<vmem>>, vector<16x13xf32>,
    %c0_46 = arith.constant 0 : index
    %c0_47 = arith.constant 0 : index
    %60 = vector.load %arg17[%c0_46, %c0_47] : memref<13x256xbf16, #tpu.memory_space<vmem>>, vector<13x256xbf16>
    %61 = arith.truncf %58 : vector<16x13xf32> to vector<16x13xbf16>
    %cst_48 = arith.constant dense<0.000000e+00> : vector<16x256xf32>
    %62 = tpu.matmul %61, %60, %cst_48 {dimension_numbers = #tpu.dot_dimension_numbers<[1], [0], [0], [1], [0, 0, 1, 1], [], []>} : vector<16x13xbf16>, vector<13x256xbf16>, vector<16x256xf32> -> vector<16x256xf32>
    %c0_49 = arith.constant 0 : index
    %c0_50 = arith.constant 0 : index
    %63 = vector.load %arg18[%c0_49, %c0_50] : memref<1x256xf32, #tpu.memory_space<vmem>>, vector<1x256xf32>
    %64 = vector.broadcast %63 : vector<1x256xf32> to vector<16x256xf32>
    %65 = arith.addf %62, %64 : vector<16x256xf32>
    %cst_51 = arith.constant 0.000000e+00 : f32
    %66 = vector.broadcast %cst_51 : f32 to vector<16x256xf32>
    %67 = arith.maximumf %65, %66 : vector<16x256xf32>
    %c0_52 = arith.constant 0 : index
    %c0_53 = arith.constant 0 : index
    %68 = vector.load %arg19[%c0_52, %c0_53] : memref<256x256xbf16, #tpu.memory_space<vmem>>, vector<256x256xbf16>
    %69 = arith.truncf %67 : vector<16x256xf32> to vector<16x256xbf16>
    %cst_54 = arith.constant dense<0.000000e+00> : vector<16x256xf32>
    %70 = tpu.matmul %69, %68, %cst_54 {dimension_numbers = #tpu.dot_dimension_numbers<[1], [0], [0], [1], [0, 0, 1, 1], [], []>} : vector<16x256xbf16>, vector<256x256xbf16>, vector<16x256xf32> -> vector<16x256xf32>
    %c0_55 = arith.constant 0 : index
    %c0_56 = arith.constant 0 : index
    %71 = vector.load %arg20[%c0_55, %c0_56] : memref<1x256xf32, #tpu.memory_space<vmem>>, vector<1x256xf32>
    %72 = vector.broadcast %71 : vector<1x256xf32> to vector<16x256xf32>
    %73 = arith.addf %70, %72 : vector<16x256xf32>
    %cst_57 = arith.constant 0.000000e+00 : f32
    %74 = vector.broadcast %cst_57 : f32 to vector<16x256xf32>
    %75 = arith.maximumf %73, %74 : vector<16x256xf32>
    %c0_58 = arith.constant 0 : index
    %c0_59 = arith.constant 0 : index
    %76 = vector.load %arg21[%c0_58, %c0_59] : memref<256x9xbf16, #tpu.memory_space<vmem>>, vector<256x9xbf16>
    %77 = arith.truncf %75 : vector<16x256xf32> to vector<16x256xbf16>
    %cst_60 = arith.constant dense<0.000000e+00> : vector<16x9xf32>
    %78 = tpu.matmul %77, %76, %cst_60 {dimension_numbers = #tpu.dot_dimension_numbers<[1], [0], [0], [1], [0, 0, 1, 1], [], []>} : vector<16x256xbf16>, vector<256x9xbf16>, vector<16x9xf32> -> vector<16x9xf32>
    %c0_61 = arith.constant 0 : index
    %c0_62 = arith.constant 0 : index
    %79 = vector.load %arg22[%c0_61, %c0_62] : memref<1x9xf32, #tpu.memory_space<vmem>>, vector<1x9xf32>
    %80 = vector.broadcast %79 : vector<1x9xf32> to vector<16x9xf32>
    %81 = arith.addf %78, %80 : vector<16x9xf32>
    %cst_63 = arith.constant dense<0xFF800000> : vector<16xf32>
    %82 = vector.multi_reduction <maximumf>, %81, %cst_63 [1] : vector<16x9xf32> to vector<16xf32>
    %83 = vector.shape_cast %82 : vector<16xf32> to vector<16x1xf32>
    %84 = vector.broadcast %83 : vector<16x1xf32> to vector<16x9xf32>
    %85 = arith.subf %81, %84 : vector<16x9xf32>
    %86 = math.exp %85 : vector<16x9xf32>
    %cst_64 = arith.constant dense<0.000000e+00> : vector<16xf32>
    %87 = vector.multi_reduction <add>, %86, %cst_64 [1] : vector<16x9xf32> to vector<16xf32>
    %88 = vector.shape_cast %87 : vector<16xf32> to vector<16x1xf32>
    %89 = math.log %88 : vector<16x1xf32>
    %90 = vector.broadcast %89 : vector<16x1xf32> to vector<16x9xf32>
    %91 = arith.subf %85, %90 : vector<16x9xf32>
    %c0_65 = arith.constant 0 : index
    %c0_66 = arith.constant 0 : index
    %92 = vector.load %arg24[%c0_65, %c0_66] : memref<16x9xf32, #tpu.memory_space<vmem>>, vector<16x9xf32>
    tpu.vector_store %arg24[%c0_65, %c0_66], %91 {strides = array<i32>} : memref<16x9xf32, #tpu.memory_space<vmem>>, vector<16x9xf32>,
    return
  }
  func.func @transform_0(%arg0: i32) -> (i32, i32) {
    %c0_i32 = arith.constant 0 : i32
    %c0_i32_0 = arith.constant 0 : i32
    return %arg0, %c0_i32 : i32, i32
  }
  func.func @transform_1(%arg0: i32) -> (i32, i32, i32) {
    %c0_i32 = arith.constant 0 : i32
    %c0_i32_0 = arith.constant 0 : i32
    %c0_i32_1 = arith.constant 0 : i32
    return %arg0, %c0_i32, %c0_i32_0 : i32, i32, i32
  }
  func.func @transform_2(%arg0: i32) -> (i32, i32) {
    %c0_i32 = arith.constant 0 : i32
    %c0_i32_0 = arith.constant 0 : i32
    %c0_i32_1 = arith.constant 0 : i32
    return %c0_i32, %c0_i32_0 : i32, i32
  }
  func.func @transform_3(%arg0: i32) -> (i32, i32) {
    %c0_i32 = arith.constant 0 : i32
    %c0_i32_0 = arith.constant 0 : i32
    %c0_i32_1 = arith.constant 0 : i32
    return %c0_i32, %c0_i32_0 : i32, i32
  }
  func.func @transform_4(%arg0: i32) -> (i32, i32) {
    %c0_i32 = arith.constant 0 : i32
    %c0_i32_0 = arith.constant 0 : i32
    %c0_i32_1 = arith.constant 0 : i32
    return %c0_i32, %c0_i32_0 : i32, i32
  }
  func.func @transform_5(%arg0: i32) -> (i32, i32) {
    %c0_i32 = arith.constant 0 : i32
    %c0_i32_0 = arith.constant 0 : i32
    %c0_i32_1 = arith.constant 0 : i32
    return %c0_i32, %c0_i32_0 : i32, i32
  }
  func.func @transform_6(%arg0: i32) -> (i32, i32) {
    %c0_i32 = arith.constant 0 : i32
    %c0_i32_0 = arith.constant 0 : i32
    %c0_i32_1 = arith.constant 0 : i32
    return %c0_i32, %c0_i32_0 : i32, i32
  }
  func.func @transform_7(%arg0: i32) -> (i32, i32) {
    %c0_i32 = arith.constant 0 : i32
    %c0_i32_0 = arith.constant 0 : i32
    %c0_i32_1 = arith.constant 0 : i32
    return %c0_i32, %c0_i32_0 : i32, i32
  }
  func.func @transform_8(%arg0: i32) -> (i32, i32) {
    %c0_i32 = arith.constant 0 : i32
    %c0_i32_0 = arith.constant 0 : i32
    %c0_i32_1 = arith.constant 0 : i32
    return %c0_i32, %c0_i32_0 : i32, i32
  }
  func.func @transform_9(%arg0: i32) -> (i32, i32) {
    %c0_i32 = arith.constant 0 : i32
    %c0_i32_0 = arith.constant 0 : i32
    %c0_i32_1 = arith.constant 0 : i32
    return %c0_i32, %c0_i32_0 : i32, i32
  }
  func.func @transform_10(%arg0: i32) -> (i32, i32) {
    %c0_i32 = arith.constant 0 : i32
    %c0_i32_0 = arith.constant 0 : i32
    %c0_i32_1 = arith.constant 0 : i32
    return %c0_i32, %c0_i32_0 : i32, i32
  }
  func.func @transform_11(%arg0: i32) -> (i32, i32) {
    %c0_i32 = arith.constant 0 : i32
    %c0_i32_0 = arith.constant 0 : i32
    %c0_i32_1 = arith.constant 0 : i32
    return %c0_i32, %c0_i32_0 : i32, i32
  }
  func.func @transform_12(%arg0: i32) -> (i32, i32) {
    %c0_i32 = arith.constant 0 : i32
    %c0_i32_0 = arith.constant 0 : i32
    %c0_i32_1 = arith.constant 0 : i32
    return %c0_i32, %c0_i32_0 : i32, i32
  }
  func.func @transform_13(%arg0: i32) -> (i32, i32) {
    %c0_i32 = arith.constant 0 : i32
    %c0_i32_0 = arith.constant 0 : i32
    %c0_i32_1 = arith.constant 0 : i32
    return %c0_i32, %c0_i32_0 : i32, i32
  }
  func.func @transform_14(%arg0: i32) -> (i32, i32) {
    %c0_i32 = arith.constant 0 : i32
    %c0_i32_0 = arith.constant 0 : i32
    %c0_i32_1 = arith.constant 0 : i32
    return %c0_i32, %c0_i32_0 : i32, i32
  }
  func.func @transform_15(%arg0: i32) -> (i32, i32) {
    %c0_i32 = arith.constant 0 : i32
    %c0_i32_0 = arith.constant 0 : i32
    %c0_i32_1 = arith.constant 0 : i32
    return %c0_i32, %c0_i32_0 : i32, i32
  }
  func.func @transform_16(%arg0: i32) -> (i32, i32) {
    %c0_i32 = arith.constant 0 : i32
    %c0_i32_0 = arith.constant 0 : i32
    %c0_i32_1 = arith.constant 0 : i32
    return %c0_i32, %c0_i32_0 : i32, i32
  }
  func.func @transform_17(%arg0: i32) -> (i32, i32) {
    %c0_i32 = arith.constant 0 : i32
    %c0_i32_0 = arith.constant 0 : i32
    %c0_i32_1 = arith.constant 0 : i32
    return %c0_i32, %c0_i32_0 : i32, i32
  }
  func.func @transform_18(%arg0: i32) -> (i32, i32) {
    %c0_i32 = arith.constant 0 : i32
    %c0_i32_0 = arith.constant 0 : i32
    %c0_i32_1 = arith.constant 0 : i32
    return %c0_i32, %c0_i32_0 : i32, i32
  }
  func.func @transform_19(%arg0: i32) -> (i32, i32) {
    %c0_i32 = arith.constant 0 : i32
    %c0_i32_0 = arith.constant 0 : i32
    %c0_i32_1 = arith.constant 0 : i32
    return %c0_i32, %c0_i32_0 : i32, i32
  }
  func.func @transform_20(%arg0: i32) -> (i32, i32) {
    %c0_i32 = arith.constant 0 : i32
    %c0_i32_0 = arith.constant 0 : i32
    %c0_i32_1 = arith.constant 0 : i32
    return %c0_i32, %c0_i32_0 : i32, i32
  }
  func.func @transform_21(%arg0: i32) -> (i32, i32) {
    %c0_i32 = arith.constant 0 : i32
    %c0_i32_0 = arith.constant 0 : i32
    %c0_i32_1 = arith.constant 0 : i32
    return %c0_i32, %c0_i32_0 : i32, i32
  }
  func.func @transform_22(%arg0: i32) -> (i32, i32) {
    %c0_i32 = arith.constant 0 : i32
    %c0_i32_0 = arith.constant 0 : i32
    return %arg0, %c0_i32 : i32, i32
  }
  func.func @transform_23(%arg0: i32) -> (i32, i32) {
    %c0_i32 = arith.constant 0 : i32
    %c0_i32_0 = arith.constant 0 : i32
    return %arg0, %c0_i32 : i32, i32
  }
}

</mosaic_0001>

<llo_original>
// kernel: tpu_custom_call.1
$region0: #{tpu_custom_call.1}
  #allocation0 [shape = 'u32[]', space=smem, size = 0x4, offset = 0x4, fixed_abs, tag = 'smem constant byte address 0x4 - core index']
  #allocation1 [shape = 'u32[144,128]{1,0:T(1,128)}', space=vmem, size = 0x12000, scoped, tag = 'internal scratch']
  %s0 = inlined_call_operand.hbm [shape: f32[2,16], index: 0, kind: input, shape index: {}]
  %s1 = inlined_call_operand.hbm [shape: f32[2,8,32], index: 1, kind: input, shape index: {}]
  %s2 = inlined_call_operand.hbm [shape: bf16[16,32], index: 2, kind: input, shape index: {}]
  %s3 = inlined_call_operand.hbm [shape: f32[1,32], index: 3, kind: input, shape index: {}]
  %s4 = inlined_call_operand.hbm [shape: bf16[32,64], index: 4, kind: input, shape index: {}]
  %s5 = inlined_call_operand.hbm [shape: f32[1,64], index: 5, kind: input, shape index: {}]
  %s6 = inlined_call_operand.vmem [shape: bf16[64,32], index: 6, kind: input, shape index: {}]
  %s7 = inlined_call_operand.hbm [shape: f32[1,32], index: 7, kind: input, shape index: {}]
  %s8 = inlined_call_operand.hbm [shape: bf16[32,256], index: 8, kind: input, shape index: {}]
  %s9 = inlined_call_operand.hbm [shape: f32[1,256], index: 9, kind: input, shape index: {}]
  %s10 = inlined_call_operand.vmem [shape: bf16[256,256], index: 10, kind: input, shape index: {}]
  %s11 = inlined_call_operand.hbm [shape: f32[1,256], index: 11, kind: input, shape index: {}]
  %s12 = inlined_call_operand.hbm [shape: bf16[256,256], index: 12, kind: input, shape index: {}]
  %s13 = inlined_call_operand.hbm [shape: f32[1,256], index: 13, kind: input, shape index: {}]
  %s14 = inlined_call_operand.vmem [shape: f32[256,13], index: 14, kind: input, shape index: {}]
  %s15 = inlined_call_operand.hbm [shape: f32[1,13], index: 15, kind: input, shape index: {}]
  %s16 = inlined_call_operand.hbm [shape: bf16[13,256], index: 16, kind: input, shape index: {}]
  %s17 = inlined_call_operand.hbm [shape: f32[1,256], index: 17, kind: input, shape index: {}]
  %s18 = inlined_call_operand.vmem [shape: bf16[256,256], index: 18, kind: input, shape index: {}]
  %s19 = inlined_call_operand.hbm [shape: f32[1,256], index: 19, kind: input, shape index: {}]
  %s20 = inlined_call_operand.vmem [shape: bf16[256,9], index: 20, kind: input, shape index: {}]
  %s21 = inlined_call_operand.vmem [shape: f32[1,9], index: 21, kind: input, shape index: {}]
  %s22 = inlined_call_operand.hbm [shape: f32[16,13], index: 22, kind: output, shape index: {0}]
  %s23 = inlined_call_operand.hbm [shape: f32[16,9], index: 23, kind: output, shape index: {1}]
  %24 = xla_tuple %s22, %s23
  %s25 = sld [smem:[#allocation0]]
  $region170: #{tpu_custom_call.1} parent=0
    _
  %s27 = ssub.s32 1, %s25
  %s28 = scalar_select 0, %s27, %s25
  $region1: #{tpu_custom_call.1} parent=0
    #allocation2 [shape = 'u8[1024]{0}', space=vmem, size = 0x400, scoped, tag = 'input window, operand 0, single buffered']
    #allocation3 [shape = 's32[1]{0}', space=sflag, size = 0x4, scoped, tag = 'scoped memory for tpu_custom_call.1']
    #allocation4 [shape = 's32[1]{0}', space=sflag, size = 0x4, scoped, tag = 'scoped memory for tpu_custom_call.1']
    #allocation5 [shape = 'u8[8192]{0}', space=vmem, size = 0x2000, scoped, tag = 'input window, operand 1, single buffered']
    #allocation6 [shape = 's32[1]{0}', space=sflag, size = 0x4, scoped, tag = 'scoped memory for tpu_custom_call.1']
    #allocation7 [shape = 'u8[4096]{0}', space=vmem, size = 0x1000, scoped, tag = 'input window, operand 2, single buffered']
    #allocation8 [shape = 'u8[512]{0}', space=vmem, size = 0x400, scoped, tag = 'input window, operand 3, single buffered']
    #allocation9 [shape = 's32[1]{0}', space=sflag, size = 0x4, scoped, tag = 'scoped memory for tpu_custom_call.1']
    #allocation10 [shape = 'u8[8192]{0}', space=vmem, size = 0x2000, scoped, tag = 'input window, operand 4, single buffered']
    #allocation11 [shape = 'u8[512]{0}', space=vmem, size = 0x400, scoped, tag = 'input window, operand 5, single buffered']
    #allocation12 [shape = 's32[1]{0}', space=sflag, size = 0x4, scoped, tag = 'scoped memory for tpu_custom_call.1']
    #allocation13 [shape = 'u8[512]{0}', space=vmem, size = 0x400, scoped, tag = 'input window, operand 7, single buffered']
    #allocation14 [shape = 'u8[16384]{0}', space=vmem, size = 0x4000, scoped, tag = 'input window, operand 8, single buffered']
    #allocation15 [shape = 's32[1]{0}', space=sflag, size = 0x4, scoped, tag = 'scoped memory for tpu_custom_call.1']
    #allocation16 [shape = 'u8[1024]{0}', space=vmem, size = 0x400, scoped, tag = 'input window, operand 9, single buffered']
    #allocation17 [shape = 'u8[1024]{0}', space=vmem, size = 0x400, scoped, tag = 'input window, operand 11, single buffered']
    #allocation18 [shape = 's32[1]{0}', space=sflag, size = 0x4, scoped, tag = 'scoped memory for tpu_custom_call.1']
    #allocation19 [shape = 'u8[131072]{0}', space=vmem, size = 0x20000, scoped, tag = 'input window, operand 12, single buffered']
    #allocation20 [shape = 'u8[1024]{0}', space=vmem, size = 0x400, scoped, tag = 'input window, operand 13, single buffered']
    #allocation21 [shape = 's32[1]{0}', space=sflag, size = 0x4, scoped, tag = 'scoped memory for tpu_custom_call.1']
    #allocation22 [shape = 'u8[512]{0}', space=vmem, size = 0x400, scoped, tag = 'input window, operand 15, single buffered']
    #allocation23 [shape = 'u8[8192]{0}', space=vmem, size = 0x2000, scoped, tag = 'input window, operand 16, single buffered']
    #allocation24 [shape = 's32[1]{0}', space=sflag, size = 0x4, scoped, tag = 'scoped memory for tpu_custom_call.1']
    #allocation25 [shape = 'u8[1024]{0}', space=vmem, size = 0x400, scoped, tag = 'input window, operand 17, single buffered']
    #allocation26 [shape = 'u8[1024]{0}', space=vmem, size = 0x400, scoped, tag = 'input window, operand 19, single buffered']
    #allocation27 [shape = 's32[1]{0}', space=sflag, size = 0x4, scoped, tag = 'scoped memory for tpu_custom_call.1']
    #allocation28 [shape = 'u8[8192]{0}', space=vmem, size = 0x2000, scoped, tag = 'output window, operand 0, single buffered']
    #allocation29 [shape = 'u8[8192]{0}', space=vmem, size = 0x2000, scoped, tag = 'output window, operand 1, single buffered']
    #allocation30 [shape = 's32[1]{0}', space=sflag, size = 0x4, scoped, tag = 'scoped memory for tpu_custom_call.1']
    %29 = vsyncpa [#allocation3], 0
    %30 = vsyncpa [#allocation6], 0
    %31 = vsyncpa [#allocation9], 0
    %32 = vsyncpa [#allocation12], 0
    %33 = vsyncpa [#allocation15], 0
    %34 = vsyncpa [#allocation18], 0
    %35 = vsyncpa [#allocation21], 0
    %36 = vsyncpa [#allocation24], 0
    %37 = vsyncpa [#allocation27], 0
    %38 = vsyncpa [#allocation4], 0
    %39 = vsyncpa [#allocation30], 0
    // Predicated region
    $region2: #{tpu_custom_call.1} parent=1 // pred_check
      _
    $region3: #{tpu_custom_call.1} parent=1 // pred_check_branch
      %41 = sbr.rel (0) target = $region5
    $region4: #{tpu_custom_call.1} parent=1 // pred_region
      %s43 = ssub.s32 32, 32
      %44 = vsyncadd [#allocation3], %s43
      %s46 = sshll.u32 [#allocation2], 4
      %s47 = int_to_ptr.vmem [resolvable:$true] %s46
      %49 = dma.hbm_to_vmem [thread:$0]  %s0, 32, %s47, [#allocation3]
    $region5: #{tpu_custom_call.1} parent=1 // pred_fallthru
      _
    // Predicated region
    $region6: #{tpu_custom_call.1} parent=1 // pred_check
      _
    $region7: #{tpu_custom_call.1} parent=1 // pred_check_branch
      %51 = sbr.rel (0) target = $region9
    $region8: #{tpu_custom_call.1} parent=1 // pred_region
      %s53 = ssub.s32 256, 256
      %54 = vsyncadd [#allocation6], %s53
      %s55 = sshll.u32 [#allocation5], 4
      %s56 = int_to_ptr.vmem [resolvable:$true] %s55
      %61 = dma.hbm_to_vmem [thread:$0]  %s1, 256, %s56, [#allocation6], 128, 128, 8
    $region9: #{tpu_custom_call.1} parent=1 // pred_fallthru
      _
    // Predicated region
    $region10: #{tpu_custom_call.1} parent=1 // pred_check
      _
    $region11: #{tpu_custom_call.1} parent=1 // pred_check_branch
      %63 = sbr.rel (0) target = $region13
    $region12: #{tpu_custom_call.1} parent=1 // pred_region
      %s65 = ssub.s32 128, 128
      %66 = vsyncadd [#allocation6], %s65
      %s67 = sshll.u32 [#allocation7], 4
      %s68 = int_to_ptr.vmem [resolvable:$true] %s67
      %73 = dma.hbm_to_vmem [thread:$0]  %s2, 128, %s68, [#allocation6], 64, 64, 4
    $region13: #{tpu_custom_call.1} parent=1 // pred_fallthru
      _
    // Predicated region
    $region14: #{tpu_custom_call.1} parent=1 // pred_check
      _
    $region15: #{tpu_custom_call.1} parent=1 // pred_check_branch
      %75 = sbr.rel (0) target = $region17
    $region16: #{tpu_custom_call.1} parent=1 // pred_region
      %s77 = ssub.s32 16, 16
      %78 = vsyncadd [#allocation9], %s77
      %s80 = sshll.u32 [#allocation8], 4
      %s81 = int_to_ptr.vmem [resolvable:$true] %s80
      %83 = dma.hbm_to_vmem [thread:$0]  %s3, 16, %s81, [#allocation9]
    $region17: #{tpu_custom_call.1} parent=1 // pred_fallthru
      _
    // Predicated region
    $region18: #{tpu_custom_call.1} parent=1 // pred_check
      _
    $region19: #{tpu_custom_call.1} parent=1 // pred_check_branch
      %85 = sbr.rel (0) target = $region21
    $region20: #{tpu_custom_call.1} parent=1 // pred_region
      %s87 = ssub.s32 256, 256
      %88 = vsyncadd [#allocation9], %s87
      %s89 = sshll.u32 [#allocation10], 4
      %s90 = int_to_ptr.vmem [resolvable:$true] %s89
      %95 = dma.hbm_to_vmem [thread:$0]  %s4, 256, %s90, [#allocation9], 64, 64, 4
    $region21: #{tpu_custom_call.1} parent=1 // pred_fallthru
      _
    // Predicated region
    $region22: #{tpu_custom_call.1} parent=1 // pred_check
      _
    $region23: #{tpu_custom_call.1} parent=1 // pred_check_branch
      %97 = sbr.rel (0) target = $region25
    $region24: #{tpu_custom_call.1} parent=1 // pred_region
      %s99 = ssub.s32 16, 16
      %100 = vsyncadd [#allocation12], %s99
      %s102 = sshll.u32 [#allocation11], 4
      %s103 = int_to_ptr.vmem [resolvable:$true] %s102
      %105 = dma.hbm_to_vmem [thread:$0]  %s5, 16, %s103, [#allocation12]
    $region25: #{tpu_custom_call.1} parent=1 // pred_fallthru
      _
    // Predicated region
    $region26: #{tpu_custom_call.1} parent=1 // pred_check
      _
    $region27: #{tpu_custom_call.1} parent=1 // pred_check_branch
      %107 = sbr.rel (0) target = $region29
    $region28: #{tpu_custom_call.1} parent=1 // pred_region
      _
    $region29: #{tpu_custom_call.1} parent=1 // pred_fallthru
      _
    // Predicated region
    $region30: #{tpu_custom_call.1} parent=1 // pred_check
      _
    $region31: #{tpu_custom_call.1} parent=1 // pred_check_branch
      %109 = sbr.rel (0) target = $region33
    $region32: #{tpu_custom_call.1} parent=1 // pred_region
      %s111 = ssub.s32 16, 16
      %112 = vsyncadd [#allocation12], %s111
      %s114 = sshll.u32 [#allocation13], 4
      %s115 = int_to_ptr.vmem [resolvable:$true] %s114
      %117 = dma.hbm_to_vmem [thread:$0]  %s7, 16, %s115, [#allocation12]
    $region33: #{tpu_custom_call.1} parent=1 // pred_fallthru
      _
    // Predicated region
    $region34: #{tpu_custom_call.1} parent=1 // pred_check
      _
    $region35: #{tpu_custom_call.1} parent=1 // pred_check_branch
      %119 = sbr.rel (0) target = $region37
    $region36: #{tpu_custom_call.1} parent=1 // pred_region
      %s121 = ssub.s32 512, 512
      %122 = vsyncadd [#allocation15], %s121
      %s123 = sshll.u32 [#allocation14], 4
      %s124 = int_to_ptr.vmem [resolvable:$true] %s123
      %129 = dma.hbm_to_vmem [thread:$0]  %s8, 512, %s124, [#allocation15], 128, 128, 8
    $region37: #{tpu_custom_call.1} parent=1 // pred_fallthru
      _
    // Predicated region
    $region38: #{tpu_custom_call.1} parent=1 // pred_check
      _
    $region39: #{tpu_custom_call.1} parent=1 // pred_check_branch
      %131 = sbr.rel (0) target = $region41
    $region40: #{tpu_custom_call.1} parent=1 // pred_region
      %s133 = ssub.s32 32, 32
      %134 = vsyncadd [#allocation15], %s133
      %s136 = sshll.u32 [#allocation16], 4
      %s137 = int_to_ptr.vmem [resolvable:$true] %s136
      %139 = dma.hbm_to_vmem [thread:$0]  %s9, 32, %s137, [#allocation15]
    $region41: #{tpu_custom_call.1} parent=1 // pred_fallthru
      _
    // Predicated region
    $region42: #{tpu_custom_call.1} parent=1 // pred_check
      _
    $region43: #{tpu_custom_call.1} parent=1 // pred_check_branch
      %141 = sbr.rel (0) target = $region45
    $region44: #{tpu_custom_call.1} parent=1 // pred_region
      _
    $region45: #{tpu_custom_call.1} parent=1 // pred_fallthru
      _
    // Predicated region
    $region46: #{tpu_custom_call.1} parent=1 // pred_check
      _
    $region47: #{tpu_custom_call.1} parent=1 // pred_check_branch
      %143 = sbr.rel (0) target = $region49
    $region48: #{tpu_custom_call.1} parent=1 // pred_region
      %s145 = ssub.s32 32, 32
      %146 = vsyncadd [#allocation18], %s145
      %s148 = sshll.u32 [#allocation17], 4
      %s149 = int_to_ptr.vmem [resolvable:$true] %s148
      %151 = dma.hbm_to_vmem [thread:$0]  %s11, 32, %s149, [#allocation18]
    $region49: #{tpu_custom_call.1} parent=1 // pred_fallthru
      _
    // Predicated region
    $region50: #{tpu_custom_call.1} parent=1 // pred_check
      _
    $region51: #{tpu_custom_call.1} parent=1 // pred_check_branch
      %153 = sbr.rel (0) target = $region53
    $region52: #{tpu_custom_call.1} parent=1 // pred_region
      %s155 = ssub.s32 4096, 4096
      %156 = vsyncadd [#allocation18], %s155
      %s157 = sshll.u32 [#allocation19], 4
      %s158 = int_to_ptr.vmem [resolvable:$true] %s157
      %163 = dma.hbm_to_vmem [thread:$0]  %s12, 4096, %s158, [#allocation18], 128, 128, 8
    $region53: #{tpu_custom_call.1} parent=1 // pred_fallthru
      _
    // Predicated region
    $region54: #{tpu_custom_call.1} parent=1 // pred_check
      _
    $region55: #{tpu_custom_call.1} parent=1 // pred_check_branch
      %165 = sbr.rel (0) target = $region57
    $region56: #{tpu_custom_call.1} parent=1 // pred_region
      %s167 = ssub.s32 32, 32
      %168 = vsyncadd [#allocation21], %s167
      %s170 = sshll.u32 [#allocation20], 4
      %s171 = int_to_ptr.vmem [resolvable:$true] %s170
      %173 = dma.hbm_to_vmem [thread:$0]  %s13, 32, %s171, [#allocation21]
    $region57: #{tpu_custom_call.1} parent=1 // pred_fallthru
      _
    // Predicated region
    $region58: #{tpu_custom_call.1} parent=1 // pred_check
      _
    $region59: #{tpu_custom_call.1} parent=1 // pred_check_branch
      %175 = sbr.rel (0) target = $region61
    $region60: #{tpu_custom_call.1} parent=1 // pred_region
      _
    $region61: #{tpu_custom_call.1} parent=1 // pred_fallthru
      _
    // Predicated region
    $region62: #{tpu_custom_call.1} parent=1 // pred_check
      _
    $region63: #{tpu_custom_call.1} parent=1 // pred_check_branch
      %177 = sbr.rel (0) target = $region65
    $region64: #{tpu_custom_call.1} parent=1 // pred_region
      %s179 = ssub.s32 16, 16
      %180 = vsyncadd [#allocation21], %s179
      %s182 = sshll.u32 [#allocation22], 4
      %s183 = int_to_ptr.vmem [resolvable:$true] %s182
      %185 = dma.hbm_to_vmem [thread:$0]  %s15, 16, %s183, [#allocation21]
    $region65: #{tpu_custom_call.1} parent=1 // pred_fallthru
      _
    // Predicated region
    $region66: #{tpu_custom_call.1} parent=1 // pred_check
      _
    $region67: #{tpu_custom_call.1} parent=1 // pred_check_branch
      %187 = sbr.rel (0) target = $region69
    $region68: #{tpu_custom_call.1} parent=1 // pred_region
      %s189 = ssub.s32 256, 256
      %190 = vsyncadd [#allocation24], %s189
      %s191 = sshll.u32 [#allocation23], 4
      %s192 = int_to_ptr.vmem [resolvable:$true] %s191
      %197 = dma.hbm_to_vmem [thread:$0]  %s16, 256, %s192, [#allocation24], 128, 128, 8
    $region69: #{tpu_custom_call.1} parent=1 // pred_fallthru
      _
    // Predicated region
    $region70: #{tpu_custom_call.1} parent=1 // pred_check
      _
    $region71: #{tpu_custom_call.1} parent=1 // pred_check_branch
      %199 = sbr.rel (0) target = $region73
    $region72: #{tpu_custom_call.1} parent=1 // pred_region
      %s201 = ssub.s32 32, 32
      %202 = vsyncadd [#allocation24], %s201
      %s204 = sshll.u32 [#allocation25], 4
      %s205 = int_to_ptr.vmem [resolvable:$true] %s204
      %207 = dma.hbm_to_vmem [thread:$0]  %s17, 32, %s205, [#allocation24]
    $region73: #{tpu_custom_call.1} parent=1 // pred_fallthru
      _
    // Predicated region
    $region74: #{tpu_custom_call.1} parent=1 // pred_check
      _
    $region75: #{tpu_custom_call.1} parent=1 // pred_check_branch
      %209 = sbr.rel (0) target = $region77
    $region76: #{tpu_custom_call.1} parent=1 // pred_region
      _
    $region77: #{tpu_custom_call.1} parent=1 // pred_fallthru
      _
    // Predicated region
    $region78: #{tpu_custom_call.1} parent=1 // pred_check
      _
    $region79: #{tpu_custom_call.1} parent=1 // pred_check_branch
      %211 = sbr.rel (0) target = $region81
    $region80: #{tpu_custom_call.1} parent=1 // pred_region
      %s213 = ssub.s32 32, 32
      %214 = vsyncadd [#allocation27], %s213
      %s216 = sshll.u32 [#allocation26], 4
      %s217 = int_to_ptr.vmem [resolvable:$true] %s216
      %219 = dma.hbm_to_vmem [thread:$0]  %s19, 32, %s217, [#allocation27]
    $region81: #{tpu_custom_call.1} parent=1 // pred_fallthru
      _
    // Predicated region
    $region82: #{tpu_custom_call.1} parent=1 // pred_check
      _
    $region83: #{tpu_custom_call.1} parent=1 // pred_check_branch
      %221 = sbr.rel (0) target = $region85
    $region84: #{tpu_custom_call.1} parent=1 // pred_region
      _
    $region85: #{tpu_custom_call.1} parent=1 // pred_fallthru
      _
    // Predicated region
    $region86: #{tpu_custom_call.1} parent=1 // pred_check
      _
    $region87: #{tpu_custom_call.1} parent=1 // pred_check_branch
      %223 = sbr.rel (0) target = $region89
    $region88: #{tpu_custom_call.1} parent=1 // pred_region
      _
    $region89: #{tpu_custom_call.1} parent=1 // pred_fallthru
      _
    // Predicated region
    $region90: #{tpu_custom_call.1} parent=1 // pred_check
      _
    $region91: #{tpu_custom_call.1} parent=1 // pred_check_branch
      %225 = sbr.rel (0) target = $region93
    $region92: #{tpu_custom_call.1} parent=1 // pred_region
      %226 = dma.done [#allocation3], 32
    $region93: #{tpu_custom_call.1} parent=1 // pred_fallthru
      _
    // Predicated region
    $region94: #{tpu_custom_call.1} parent=1 // pred_check
      _
    $region95: #{tpu_custom_call.1} parent=1 // pred_check_branch
      %228 = sbr.rel (0) target = $region97
    $region96: #{tpu_custom_call.1} parent=1 // pred_region
      %229 = dma.done [#allocation6], 256
    $region97: #{tpu_custom_call.1} parent=1 // pred_fallthru
      _
    // Predicated region
    $region98: #{tpu_custom_call.1} parent=1 // pred_check
      _
    $region99: #{tpu_custom_call.1} parent=1 // pred_check_branch
      %231 = sbr.rel (0) target = $region101
    $region100: #{tpu_custom_call.1} parent=1 // pred_region
      %232 = dma.done [#allocation6], 128
    $region101: #{tpu_custom_call.1} parent=1 // pred_fallthru
      _
    // Predicated region
    $region102: #{tpu_custom_call.1} parent=1 // pred_check
      _
    $region103: #{tpu_custom_call.1} parent=1 // pred_check_branch
      %234 = sbr.rel (0) target = $region105
    $region104: #{tpu_custom_call.1} parent=1 // pred_region
      %235 = dma.done [#allocation9], 16
    $region105: #{tpu_custom_call.1} parent=1 // pred_fallthru
      _
    // Predicated region
    $region106: #{tpu_custom_call.1} parent=1 // pred_check
      _
    $region107: #{tpu_custom_call.1} parent=1 // pred_check_branch
      %237 = sbr.rel (0) target = $region109
    $region108: #{tpu_custom_call.1} parent=1 // pred_region
      %238 = dma.done [#allocation9], 256
    $region109: #{tpu_custom_call.1} parent=1 // pred_fallthru
      _
    // Predicated region
    $region110: #{tpu_custom_call.1} parent=1 // pred_check
      _
    $region111: #{tpu_custom_call.1} parent=1 // pred_check_branch
      %240 = sbr.rel (0) target = $region113
    $region112: #{tpu_custom_call.1} parent=1 // pred_region
      %241 = dma.done [#allocation12], 16
    $region113: #{tpu_custom_call.1} parent=1 // pred_fallthru
      _
    // Predicated region
    $region114: #{tpu_custom_call.1} parent=1 // pred_check
      _
    $region115: #{tpu_custom_call.1} parent=1 // pred_check_branch
      %243 = sbr.rel (0) target = $region117
    $region116: #{tpu_custom_call.1} parent=1 // pred_region
      %244 = dma.done [#allocation12], 16
    $region117: #{tpu_custom_call.1} parent=1 // pred_fallthru
      _
    // Predicated region
    $region118: #{tpu_custom_call.1} parent=1 // pred_check
      _
    $region119: #{tpu_custom_call.1} parent=1 // pred_check_branch
      %246 = sbr.rel (0) target = $region121
    $region120: #{tpu_custom_call.1} parent=1 // pred_region
      %247 = dma.done [#allocation15], 512
    $region121: #{tpu_custom_call.1} parent=1 // pred_fallthru
      _
    // Predicated region
    $region122: #{tpu_custom_call.1} parent=1 // pred_check
      _
    $region123: #{tpu_custom_call.1} parent=1 // pred_check_branch
      %249 = sbr.rel (0) target = $region125
    $region124: #{tpu_custom_call.1} parent=1 // pred_region
      %250 = dma.done [#allocation15], 32
    $region125: #{tpu_custom_call.1} parent=1 // pred_fallthru
      _
    // Predicated region
    $region126: #{tpu_custom_call.1} parent=1 // pred_check
      _
    $region127: #{tpu_custom_call.1} parent=1 // pred_check_branch
      %252 = sbr.rel (0) target = $region129
    $region128: #{tpu_custom_call.1} parent=1 // pred_region
      %253 = dma.done [#allocation18], 32
    $region129: #{tpu_custom_call.1} parent=1 // pred_fallthru
      _
    // Predicated region
    $region130: #{tpu_custom_call.1} parent=1 // pred_check
      _
    $region131: #{tpu_custom_call.1} parent=1 // pred_check_branch
      %255 = sbr.rel (0) target = $region133
    $region132: #{tpu_custom_call.1} parent=1 // pred_region
      %256 = dma.done [#allocation18], 4096
    $region133: #{tpu_custom_call.1} parent=1 // pred_fallthru
      _
    // Predicated region
    $region134: #{tpu_custom_call.1} parent=1 // pred_check
      _
    $region135: #{tpu_custom_call.1} parent=1 // pred_check_branch
      %258 = sbr.rel (0) target = $region137
    $region136: #{tpu_custom_call.1} parent=1 // pred_region
      %259 = dma.done [#allocation21], 32
    $region137: #{tpu_custom_call.1} parent=1 // pred_fallthru
      _
    // Predicated region
    $region138: #{tpu_custom_call.1} parent=1 // pred_check
      _
    $region139: #{tpu_custom_call.1} parent=1 // pred_check_branch
      %261 = sbr.rel (0) target = $region141
    $region140: #{tpu_custom_call.1} parent=1 // pred_region
      %262 = dma.done [#allocation21], 16
    $region141: #{tpu_custom_call.1} parent=1 // pred_fallthru
      _
    // Predicated region
    $region142: #{tpu_custom_call.1} parent=1 // pred_check
      _
    $region143: #{tpu_custom_call.1} parent=1 // pred_check_branch
      %264 = sbr.rel (0) target = $region145
    $region144: #{tpu_custom_call.1} parent=1 // pred_region
      %265 = dma.done [#allocation24], 256
    $region145: #{tpu_custom_call.1} parent=1 // pred_fallthru
      _
    // Predicated region
    $region146: #{tpu_custom_call.1} parent=1 // pred_check
      _
    $region147: #{tpu_custom_call.1} parent=1 // pred_check_branch
      %267 = sbr.rel (0) target = $region149
    $region148: #{tpu_custom_call.1} parent=1 // pred_region
      %268 = dma.done [#allocation24], 32
    $region149: #{tpu_custom_call.1} parent=1 // pred_fallthru
      _
    // Predicated region
    $region150: #{tpu_custom_call.1} parent=1 // pred_check
      _
    $region151: #{tpu_custom_call.1} parent=1 // pred_check_branch
      %270 = sbr.rel (0) target = $region153
    $region152: #{tpu_custom_call.1} parent=1 // pred_region
      %271 = dma.done [#allocation27], 32
    $region153: #{tpu_custom_call.1} parent=1 // pred_fallthru
      _
    %v273 = vld [vmem:[#allocation2] sm:$0x3]
    %v274 = vld [vmem:[#allocation7] sm:$0xf]
    %v275 = vld [vmem:[#allocation7 + $0x4] sm:$0xf]
    %v276 = vpack.c.bf16 %v273, %v273
    %v277 = vld [vmem:[#allocation8] sm:$0x1]
    %v279 = vlaneseq
    %v280 = vshrl.u32 %v279, 7
    %v281 = vsub.s32 0, %v280
    %v282 = vrot.slane %v277, %v281
    %v286 = vunpack.c.l.b16 %v274
    %v287 = vunpack.c.l.b16 %v275
    %v288 = vpack.c.b16 %v287, %v286
    %vm290 = vcmask 130048
    %v292 = vsel %vm290, %v276, 0
    %294 = vmatprep.subr.bf16.mxu0 0
    %295 = vmatpush1.bf16.msra.mxu0 0
    %296 = vmatprep.subr.bf16.mxu0 0
    %297 = vmatpush1.bf16.msra.mxu0 0
    %298 = vmatprep.subr.bf16.mxu0 0
    %299 = vmatpush1.bf16.msra.mxu0 0
    %300 = vmatprep.subr.bf16.mxu0 0
    %301 = vmatpush1.bf16.msra.mxu0 0
    %302 = vmatprep.subr.bf16.mxu0 0
    %303 = vmatpush1.bf16.msra.mxu0 0
    %304 = vmatprep.subr.bf16.mxu0 0
    %305 = vmatpush1.bf16.msra.mxu0 0
    %306 = vmatprep.subr.bf16.mxu0 0
    %307 = vmatpush1.bf16.msra.mxu0 0
    %308 = vmatprep.subr.bf16.mxu0 0
    %309 = vmatpush1.bf16.msra.mxu0 %v288
    %310 = vmatprep.subr.bf16.mxu0 0
    %311 = vmatpush2.bf16.msra.mxu0 0
    %312 = vmatprep.subr.bf16.mxu0 0
    %313 = vmatpush2.bf16.msra.mxu0 0
    %314 = vmatprep.subr.bf16.mxu0 0
    %315 = vmatpush2.bf16.msra.mxu0 0
    %316 = vmatprep.subr.bf16.mxu0 0
    %317 = vmatpush2.bf16.msra.mxu0 0
    %318 = vmatprep.subr.bf16.mxu0 0
    %319 = vmatpush2.bf16.msra.mxu0 0
    %320 = vmatprep.subr.bf16.mxu0 0
    %321 = vmatpush2.bf16.msra.mxu0 0
    %322 = vmatprep.subr.bf16.mxu0 0
    %323 = vmatpush2.bf16.msra.mxu0 0
    %324 = vmatprep.subr.bf16.mxu0 0
    %325 = vmatpush2.bf16.msra.mxu0 0
    %326 = vmatprep.mubr.bf16.mxu0 0
    %327 = vmatmul.mubr.bf16.gmra.mxu0 %v292
    %v328 = vpop.f32.mrf.mxu0
    %v329 = vadd.f32 %v282, %v328
    %v330 = vpop.f32.mrf.mxu0
    %v331 = vpop.f32.mrf.mxu0
    %v332 = vpop.f32.mrf.mxu0
    %333 = vdwg.mxu0
    %v334 = vmax.f32 %v329, 0.0
    %v335 = vld [vmem:[#allocation10] sm:$0xf]
    %v336 = vld [vmem:[#allocation10 + $0x4] sm:$0xf]
    %v337 = vld [vmem:[#allocation10 + $0x8] sm:$0xf]
    %v338 = vld [vmem:[#allocation10 + $0xc] sm:$0xf]
    %v339 = vpack.c.bf16 %v334, %v334
    %v340 = vld [vmem:[#allocation11] sm:$0x1]
    %v342 = vlaneseq
    %v343 = vshrl.u32 %v342, 7
    %v344 = vsub.s32 0, %v343
    %v345 = vrot.slane %v340, %v344
    %v351 = vunpack.c.l.b16 %v335
    %v352 = vunpack.c.l.b16 %v336
    %v353 = vunpack.c.l.b16 %v337
    %v354 = vunpack.c.l.b16 %v338
    %v355 = vpack.c.b16 %v352, %v351
    %v356 = vpack.c.b16 %v354, %v353
    %vm359 = vcmask 261120
    %v361 = vsel %vm359, %v339, 0
    %363 = vmatprep.subr.bf16.mxu0 0
    %364 = vmatpush1.bf16.msra.mxu0 0
    %365 = vmatprep.subr.bf16.mxu0 0
    %366 = vmatpush1.bf16.msra.mxu0 0
    %367 = vmatprep.subr.bf16.mxu0 0
    %368 = vmatpush1.bf16.msra.mxu0 0
    %369 = vmatprep.subr.bf16.mxu0 0
    %370 = vmatpush1.bf16.msra.mxu0 0
    %371 = vmatprep.subr.bf16.mxu0 0
    %372 = vmatpush1.bf16.msra.mxu0 0
    %373 = vmatprep.subr.bf16.mxu0 0
    %374 = vmatpush1.bf16.msra.mxu0 0
    %375 = vmatprep.subr.bf16.mxu0 0
    %376 = vmatpush1.bf16.msra.mxu0 %v356
    %377 = vmatprep.subr.bf16.mxu0 0
    %378 = vmatpush1.bf16.msra.mxu0 %v355
    %379 = vmatprep.subr.bf16.mxu0 0
    %380 = vmatpush2.bf16.msra.mxu0 0
    %381 = vmatprep.subr.bf16.mxu0 0
    %382 = vmatpush2.bf16.msra.mxu0 0
    %383 = vmatprep.subr.bf16.mxu0 0
    %384 = vmatpush2.bf16.msra.mxu0 0
    %385 = vmatprep.subr.bf16.mxu0 0
    %386 = vmatpush2.bf16.msra.mxu0 0
    %387 = vmatprep.subr.bf16.mxu0 0
    %388 = vmatpush2.bf16.msra.mxu0 0
    %389 = vmatprep.subr.bf16.mxu0 0
    %390 = vmatpush2.bf16.msra.mxu0 0
    %391 = vmatprep.subr.bf16.mxu0 0
    %392 = vmatpush2.bf16.msra.mxu0 0
    %393 = vmatprep.subr.bf16.mxu0 0
    %394 = vmatpush2.bf16.msra.mxu0 0
    %395 = vmatprep.mubr.bf16.mxu0 0
    %396 = vmatmul.mubr.bf16.gmra.mxu0 %v361
    %v397 = vpop.f32.mrf.mxu0
    %v398 = vadd.f32 %v345, %v397
    %v399 = vpop.f32.mrf.mxu0
    %v400 = vpop.f32.mrf.mxu0
    %v401 = vpop.f32.mrf.mxu0
    %402 = vdwg.mxu0
    %v403 = vmax.f32 %v398, 0.0
    %v404 = vld [vmem:[%s6] sm:$0xf]
    %v405 = vld [vmem:[%s6 + $0x4] sm:$0xf]
    %v406 = vld [vmem:[%s6 + $0x8] sm:$0xf]
    %v407 = vld [vmem:[%s6 + $0xc] sm:$0xf]
    %v408 = vld [vmem:[%s6 + $0x10] sm:$0xf]
    %v409 = vld [vmem:[%s6 + $0x14] sm:$0xf]
    %v410 = vld [vmem:[%s6 + $0x18] sm:$0xf]
    %v411 = vld [vmem:[%s6 + $0x1c] sm:$0xf]
    %v412 = vpack.c.bf16 %v403, %v403
    %v413 = vld [vmem:[#allocation13] sm:$0x1]
    %v415 = vlaneseq
    %v416 = vshrl.u32 %v415, 7
    %v417 = vsub.s32 0, %v416
    %v418 = vrot.slane %v413, %v417
    %v428 = vunpack.c.l.b16 %v404
    %v429 = vunpack.c.l.b16 %v405
    %v430 = vunpack.c.l.b16 %v406
    %v431 = vunpack.c.l.b16 %v407
    %v432 = vunpack.c.l.b16 %v408
    %v433 = vunpack.c.l.b16 %v409
    %v434 = vunpack.c.l.b16 %v410
    %v435 = vunpack.c.l.b16 %v411
    %v436 = vpack.c.b16 %v429, %v428
    %v437 = vpack.c.b16 %v431, %v430
    %v438 = vpack.c.b16 %v433, %v432
    %v439 = vpack.c.b16 %v435, %v434
    %vm444 = vcmask 523264
    %v446 = vsel %vm444, %v412, 0
    %448 = vmatprep.subr.bf16.mxu0 0
    %449 = vmatpush1.bf16.msra.mxu0 0
    %450 = vmatprep.subr.bf16.mxu0 0
    %451 = vmatpush1.bf16.msra.mxu0 0
    %452 = vmatprep.subr.bf16.mxu0 0
    %453 = vmatpush1.bf16.msra.mxu0 0
    %454 = vmatprep.subr.bf16.mxu0 0
    %455 = vmatpush1.bf16.msra.mxu0 0
    %456 = vmatprep.subr.bf16.mxu0 0
    %457 = vmatpush1.bf16.msra.mxu0 %v439
    %458 = vmatprep.subr.bf16.mxu0 0
    %459 = vmatpush1.bf16.msra.mxu0 %v438
    %460 = vmatprep.subr.bf16.mxu0 0
    %461 = vmatpush1.bf16.msra.mxu0 %v437
    %462 = vmatprep.subr.bf16.mxu0 0
    %463 = vmatpush1.bf16.msra.mxu0 %v436
    %464 = vmatprep.subr.bf16.mxu0 0
    %465 = vmatpush2.bf16.msra.mxu0 0
    %466 = vmatprep.subr.bf16.mxu0 0
    %467 = vmatpush2.bf16.msra.mxu0 0
    %468 = vmatprep.subr.bf16.mxu0 0
    %469 = vmatpush2.bf16.msra.mxu0 0
    %470 = vmatprep.subr.bf16.mxu0 0
    %471 = vmatpush2.bf16.msra.mxu0 0
    %472 = vmatprep.subr.bf16.mxu0 0
    %473 = vmatpush2.bf16.msra.mxu0 0
    %474 = vmatprep.subr.bf16.mxu0 0
    %475 = vmatpush2.bf16.msra.mxu0 0
    %476 = vmatprep.subr.bf16.mxu0 0
    %477 = vmatpush2.bf16.msra.mxu0 0
    %478 = vmatprep.subr.bf16.mxu0 0
    %479 = vmatpush2.bf16.msra.mxu0 0
    %480 = vmatprep.mubr.bf16.mxu0 0
    %481 = vmatmul.mubr.bf16.gmra.mxu0 %v446
    %v482 = vpop.f32.mrf.mxu0
    %v483 = vadd.f32 %v418, %v482
    %v484 = vpop.f32.mrf.mxu0
    %v485 = vpop.f32.mrf.mxu0
    %v486 = vpop.f32.mrf.mxu0
    %487 = vdwg.mxu0
    %v488 = vmax.f32 %v483, 0.0
    %v491 = vunpack.c.l.s4 1966171168
    %v492 = vunpack.c.0.s8 %v491
    %v493 = vlaneseq
    %v494 = vshrl.u32 %v493, 7
    %v495 = vsub.s32 %v492, %v494
    %v496 = vrot.slane %v488, %v495
    %v497 = vcombine.high %v496, %v496
    %v499 = vunpack.c.l.s4 1966171168
    %v500 = vunpack.c.0.s8 %v499
    %v501 = vlaneseq
    %v502 = vshrl.u32 %v501, 7
    %v503 = vsub.s32 %v500, %v502
    %v504 = vrot.slane %v496, %v503
    %v506 = vunpack.c.l.s4 1966171168
    %v507 = vunpack.c.0.s8 %v506
    %v508 = vlaneseq
    %v509 = vshrl.u32 %v508, 7
    %v510 = vsub.s32 %v507, %v509
    %v511 = vrot.slane %v497, %v510
    %v512 = vld [vmem:[#allocation5] sm:$0xff]
    %v513 = vld [vmem:[#allocation5 + $0x8] sm:$0xff]
    %v514 = vlaneseq
    %v515 = vshrl.u32 %v514, 7
    %v516 = vsub.s32 0, %v515
    %v517 = vrot.slane %v504, %v516
    %v518 = vlaneseq
    %v519 = vshrl.u32 %v518, 7
    %v520 = vsub.s32 0, %v519
    %v521 = vrot.slane %v511, %v520
    %v524 = vmul.f32 %v517, %v512
    %v525 = vmul.f32 %v521, %v513
    %v526 = vld [vmem:[#allocation14] sm:$0xff]
    %v527 = vld [vmem:[#allocation14 + $0x8] sm:$0xff]
    %v528 = vld [vmem:[#allocation14 + $0x10] sm:$0xff]
    %v529 = vld [vmem:[#allocation14 + $0x18] sm:$0xff]
    %v530 = vpack.c.bf16 %v525, %v524
    %v531 = vld [vmem:[#allocation16] sm:$0x3]
    %v533 = vlaneseq
    %v534 = vshrl.u32 %v533, 7
    %v535 = vsub.s32 0, %v534
    %v536 = vrot.slane %v531, %v535
    %v537 = vlaneseq
    %v538 = vshrl.u32 %v537, 7
    %v539 = vsub.s32 1, %v538
    %v540 = vrot.slane %v531, %v539
    %v547 = vunpack.c.l.b16 %v526
    %v548 = vunpack.c.h.b16 %v526
    %v549 = vunpack.c.l.b16 %v527
    %v550 = vunpack.c.h.b16 %v527
    %v551 = vunpack.c.l.b16 %v528
    %v552 = vunpack.c.h.b16 %v528
    %v553 = vunpack.c.l.b16 %v529
    %v554 = vunpack.c.h.b16 %v529
    %v555 = vpack.c.b16 %v549, %v547
    %v556 = vpack.c.b16 %v550, %v548
    %v557 = vpack.c.b16 %v553, %v551
    %v558 = vpack.c.b16 %v554, %v552
    %v564 = vsel %vm359, %v530, 0
    %566 = vmatprep.subr.bf16.mxu0 0
    %567 = vmatpush1.bf16.msra.mxu0 0
    %568 = vmatprep.subr.bf16.mxu0 0
    %569 = vmatpush1.bf16.msra.mxu0 0
    %570 = vmatprep.subr.bf16.mxu0 0
    %571 = vmatpush1.bf16.msra.mxu0 0
    %572 = vmatprep.subr.bf16.mxu0 0
    %573 = vmatpush1.bf16.msra.mxu0 0
    %574 = vmatprep.subr.bf16.mxu0 0
    %575 = vmatpush1.bf16.msra.mxu0 0
    %576 = vmatprep.subr.bf16.mxu0 0
    %577 = vmatpush1.bf16.msra.mxu0 0
    %578 = vmatprep.subr.bf16.mxu0 %v558
    %579 = vmatpush1.bf16.msra.mxu0 %v557
    %580 = vmatprep.subr.bf16.mxu0 %v556
    %581 = vmatpush1.bf16.msra.mxu0 %v555
    %582 = vmatprep.subr.bf16.mxu0 0
    %583 = vmatpush2.bf16.msra.mxu0 0
    %584 = vmatprep.subr.bf16.mxu0 0
    %585 = vmatpush2.bf16.msra.mxu0 0
    %586 = vmatprep.subr.bf16.mxu0 0
    %587 = vmatpush2.bf16.msra.mxu0 0
    %588 = vmatprep.subr.bf16.mxu0 0
    %589 = vmatpush2.bf16.msra.mxu0 0
    %590 = vmatprep.subr.bf16.mxu0 0
    %591 = vmatpush2.bf16.msra.mxu0 0
    %592 = vmatprep.subr.bf16.mxu0 0
    %593 = vmatpush2.bf16.msra.mxu0 0
    %594 = vmatprep.subr.bf16.mxu0 0
    %595 = vmatpush2.bf16.msra.mxu0 0
    %596 = vmatprep.subr.bf16.mxu0 0
    %597 = vmatpush2.bf16.msra.mxu0 0
    %598 = vmatprep.mubr.bf16.mxu0 0
    %599 = vmatmul.mubr.bf16.gmra.mxu0 %v564
    %v600 = vpop.f32.mrf.mxu0
    %v601 = vadd.f32 %v536, %v600
    %v602 = vpop.f32.mrf.mxu0
    %v603 = vadd.f32 %v540, %v602
    %v604 = vpop.f32.mrf.mxu0
    %v605 = vadd.f32 %v536, %v604
    %v606 = vpop.f32.mrf.mxu0
    %v607 = vadd.f32 %v540, %v606
    %608 = vdwg.mxu0
    %v609 = vmax.f32 %v601, 0.0
    %v610 = vmax.f32 %v603, 0.0
    %v611 = vmax.f32 %v605, 0.0
    %v612 = vmax.f32 %v607, 0.0
    %v613 = vld [vmem:[%s10] sm:$0xff]
    %v614 = vld [vmem:[%s10 + $0x8] sm:$0xff]
    %v615 = vld [vmem:[%s10 + $0x10] sm:$0xff]
    %v616 = vld [vmem:[%s10 + $0x18] sm:$0xff]
    %v617 = vld [vmem:[%s10 + $0x20] sm:$0xff]
    %v618 = vld [vmem:[%s10 + $0x28] sm:$0xff]
    %v619 = vld [vmem:[%s10 + $0x30] sm:$0xff]
    %v620 = vld [vmem:[%s10 + $0x38] sm:$0xff]
    %v621 = vld [vmem:[%s10 + $0x40] sm:$0xff]
    %v622 = vld [vmem:[%s10 + $0x48] sm:$0xff]
    %v623 = vld [vmem:[%s10 + $0x50] sm:$0xff]
    %v624 = vld [vmem:[%s10 + $0x58] sm:$0xff]
    %v625 = vld [vmem:[%s10 + $0x60] sm:$0xff]
    %v626 = vld [vmem:[%s10 + $0x68] sm:$0xff]
    %v627 = vld [vmem:[%s10 + $0x70] sm:$0xff]
    %v628 = vld [vmem:[%s10 + $0x78] sm:$0xff]
    %v629 = vld [vmem:[%s10 + $0x80] sm:$0xff]
    %v630 = vld [vmem:[%s10 + $0x88] sm:$0xff]
    %v631 = vld [vmem:[%s10 + $0x90] sm:$0xff]
    %v632 = vld [vmem:[%s10 + $0x98] sm:$0xff]
    %v633 = vld [vmem:[%s10 + $0xa0] sm:$0xff]
    %v634 = vld [vmem:[%s10 + $0xa8] sm:$0xff]
    %v635 = vld [vmem:[%s10 + $0xb0] sm:$0xff]
    %v636 = vld [vmem:[%s10 + $0xb8] sm:$0xff]
    %v637 = vld [vmem:[%s10 + $0xc0] sm:$0xff]
    %v638 = vld [vmem:[%s10 + $0xc8] sm:$0xff]
    %v639 = vld [vmem:[%s10 + $0xd0] sm:$0xff]
    %v640 = vld [vmem:[%s10 + $0xd8] sm:$0xff]
    %v641 = vld [vmem:[%s10 + $0xe0] sm:$0xff]
    %v642 = vld [vmem:[%s10 + $0xe8] sm:$0xff]
    %v643 = vld [vmem:[%s10 + $0xf0] sm:$0xff]
    %v644 = vld [vmem:[%s10 + $0xf8] sm:$0xff]
    %v645 = vpack.c.bf16 %v611, %v609
    %v646 = vpack.c.bf16 %v612, %v610
    %v647 = vld [vmem:[#allocation17] sm:$0x3]
    %v649 = vlaneseq
    %v650 = vshrl.u32 %v649, 7
    %v651 = vsub.s32 0, %v650
    %v652 = vrot.slane %v647, %v651
    %v653 = vlaneseq
    %v654 = vshrl.u32 %v653, 7
    %v655 = vsub.s32 1, %v654
    %v656 = vrot.slane %v647, %v655
    %v691 = vunpack.c.l.b16 %v613
    %v692 = vunpack.c.h.b16 %v613
    %v693 = vunpack.c.l.b16 %v614
    %v694 = vunpack.c.h.b16 %v614
    %v695 = vunpack.c.l.b16 %v615
    %v696 = vunpack.c.h.b16 %v615
    %v697 = vunpack.c.l.b16 %v616
    %v698 = vunpack.c.h.b16 %v616
    %v699 = vunpack.c.l.b16 %v617
    %v700 = vunpack.c.h.b16 %v617
    %v701 = vunpack.c.l.b16 %v618
    %v702 = vunpack.c.h.b16 %v618
    %v703 = vunpack.c.l.b16 %v619
    %v704 = vunpack.c.h.b16 %v619
    %v705 = vunpack.c.l.b16 %v620
    %v706 = vunpack.c.h.b16 %v620
    %v707 = vunpack.c.l.b16 %v621
    %v708 = vunpack.c.h.b16 %v621
    %v709 = vunpack.c.l.b16 %v622
    %v710 = vunpack.c.h.b16 %v622
    %v711 = vunpack.c.l.b16 %v623
    %v712 = vunpack.c.h.b16 %v623
    %v713 = vunpack.c.l.b16 %v624
    %v714 = vunpack.c.h.b16 %v624
    %v715 = vunpack.c.l.b16 %v625
    %v716 = vunpack.c.h.b16 %v625
    %v717 = vunpack.c.l.b16 %v626
    %v718 = vunpack.c.h.b16 %v626
    %v719 = vunpack.c.l.b16 %v627
    %v720 = vunpack.c.h.b16 %v627
    %v721 = vunpack.c.l.b16 %v628
    %v722 = vunpack.c.h.b16 %v628
    %v723 = vunpack.c.l.b16 %v629
    %v724 = vunpack.c.h.b16 %v629
    %v725 = vunpack.c.l.b16 %v630
    %v726 = vunpack.c.h.b16 %v630
    %v727 = vunpack.c.l.b16 %v631
    %v728 = vunpack.c.h.b16 %v631
    %v729 = vunpack.c.l.b16 %v632
    %v730 = vunpack.c.h.b16 %v632
    %v731 = vunpack.c.l.b16 %v633
    %v732 = vunpack.c.h.b16 %v633
    %v733 = vunpack.c.l.b16 %v634
    %v734 = vunpack.c.h.b16 %v634
    %v735 = vunpack.c.l.b16 %v635
    %v736 = vunpack.c.h.b16 %v635
    %v737 = vunpack.c.l.b16 %v636
    %v738 = vunpack.c.h.b16 %v636
    %v739 = vunpack.c.l.b16 %v637
    %v740 = vunpack.c.h.b16 %v637
    %v741 = vunpack.c.l.b16 %v638
    %v742 = vunpack.c.h.b16 %v638
    %v743 = vunpack.c.l.b16 %v639
    %v744 = vunpack.c.h.b16 %v639
    %v745 = vunpack.c.l.b16 %v640
    %v746 = vunpack.c.h.b16 %v640
    %v747 = vunpack.c.l.b16 %v641
    %v748 = vunpack.c.h.b16 %v641
    %v749 = vunpack.c.l.b16 %v642
    %v750 = vunpack.c.h.b16 %v642
    %v751 = vunpack.c.l.b16 %v643
    %v752 = vunpack.c.h.b16 %v643
    %v753 = vunpack.c.l.b16 %v644
    %v754 = vunpack.c.h.b16 %v644
    %v755 = vpack.c.b16 %v693, %v691
    %v756 = vpack.c.b16 %v694, %v692
    %v757 = vpack.c.b16 %v697, %v695
    %v758 = vpack.c.b16 %v698, %v696
    %v759 = vpack.c.b16 %v701, %v699
    %v760 = vpack.c.b16 %v702, %v700
    %v761 = vpack.c.b16 %v705, %v703
    %v762 = vpack.c.b16 %v706, %v704
    %v763 = vpack.c.b16 %v709, %v707
    %v764 = vpack.c.b16 %v710, %v708
    %v765 = vpack.c.b16 %v713, %v711
    %v766 = vpack.c.b16 %v714, %v712
    %v767 = vpack.c.b16 %v717, %v715
    %v768 = vpack.c.b16 %v718, %v716
    %v769 = vpack.c.b16 %v721, %v719
    %v770 = vpack.c.b16 %v722, %v720
    %v771 = vpack.c.b16 %v725, %v723
    %v772 = vpack.c.b16 %v726, %v724
    %v773 = vpack.c.b16 %v729, %v727
    %v774 = vpack.c.b16 %v730, %v728
    %v775 = vpack.c.b16 %v733, %v731
    %v776 = vpack.c.b16 %v734, %v732
    %v777 = vpack.c.b16 %v737, %v735
    %v778 = vpack.c.b16 %v738, %v736
    %v779 = vpack.c.b16 %v741, %v739
    %v780 = vpack.c.b16 %v742, %v740
    %v781 = vpack.c.b16 %v745, %v743
    %v782 = vpack.c.b16 %v746, %v744
    %v783 = vpack.c.b16 %v749, %v747
    %v784 = vpack.c.b16 %v750, %v748
    %v785 = vpack.c.b16 %v753, %v751
    %v786 = vpack.c.b16 %v754, %v752
    %819 = vmatprep.subr.bf16.mxu0 %v770
    %820 = vmatpush1.bf16.msra.mxu0 %v769
    %821 = vmatprep.subr.bf16.mxu0 %v768
    %822 = vmatpush1.bf16.msra.mxu0 %v767
    %823 = vmatprep.subr.bf16.mxu0 %v766
    %824 = vmatpush1.bf16.msra.mxu0 %v765
    %825 = vmatprep.subr.bf16.mxu0 %v764
    %826 = vmatpush1.bf16.msra.mxu0 %v763
    %827 = vmatprep.subr.bf16.mxu0 %v762
    %828 = vmatpush1.bf16.msra.mxu0 %v761
    %829 = vmatprep.subr.bf16.mxu0 %v760
    %830 = vmatpush1.bf16.msra.mxu0 %v759
    %831 = vmatprep.subr.bf16.mxu0 %v758
    %832 = vmatpush1.bf16.msra.mxu0 %v757
    %833 = vmatprep.subr.bf16.mxu0 %v756
    %834 = vmatpush1.bf16.msra.mxu0 %v755
    %835 = vmatprep.subr.bf16.mxu0 %v786
    %836 = vmatpush2.bf16.msra.mxu0 %v785
    %837 = vmatprep.subr.bf16.mxu0 %v784
    %838 = vmatpush2.bf16.msra.mxu0 %v783
    %839 = vmatprep.subr.bf16.mxu0 %v782
    %840 = vmatpush2.bf16.msra.mxu0 %v781
    %841 = vmatprep.subr.bf16.mxu0 %v780
    %842 = vmatpush2.bf16.msra.mxu0 %v779
    %843 = vmatprep.subr.bf16.mxu0 %v778
    %844 = vmatpush2.bf16.msra.mxu0 %v777
    %845 = vmatprep.subr.bf16.mxu0 %v776
    %846 = vmatpush2.bf16.msra.mxu0 %v775
    %847 = vmatprep.subr.bf16.mxu0 %v774
    %848 = vmatpush2.bf16.msra.mxu0 %v773
    %849 = vmatprep.subr.bf16.mxu0 %v772
    %850 = vmatpush2.bf16.msra.mxu0 %v771
    %851 = vmatprep.mubr.bf16.mxu0 %v646
    %852 = vmatmul.mubr.bf16.gmra.mxu0 %v645
    %v853 = vpop.f32.mrf.mxu0
    %v854 = vadd.f32 %v652, %v853
    %v855 = vpop.f32.mrf.mxu0
    %v856 = vadd.f32 %v656, %v855
    %v857 = vpop.f32.mrf.mxu0
    %v858 = vadd.f32 %v652, %v857
    %v859 = vpop.f32.mrf.mxu0
    %v860 = vadd.f32 %v656, %v859
    %861 = vdwg.mxu0
    %v862 = vmax.f32 %v854, 0.0
    %v863 = vmax.f32 %v856, 0.0
    %v864 = vmax.f32 %v858, 0.0
    %v865 = vmax.f32 %v860, 0.0
    %v866 = vld [vmem:[#allocation19] sm:$0xff]
    %v867 = vld [vmem:[#allocation19 + $0x8] sm:$0xff]
    %v868 = vld [vmem:[#allocation19 + $0x10] sm:$0xff]
    %v869 = vld [vmem:[#allocation19 + $0x18] sm:$0xff]
    %v870 = vld [vmem:[#allocation19 + $0x20] sm:$0xff]
    %v871 = vld [vmem:[#allocation19 + $0x28] sm:$0xff]
    %v872 = vld [vmem:[#allocation19 + $0x30] sm:$0xff]
    %v873 = vld [vmem:[#allocation19 + $0x38] sm:$0xff]
    %v874 = vld [vmem:[#allocation19 + $0x40] sm:$0xff]
    %v875 = vld [vmem:[#allocation19 + $0x48] sm:$0xff]
    %v876 = vld [vmem:[#allocation19 + $0x50] sm:$0xff]
    %v877 = vld [vmem:[#allocation19 + $0x58] sm:$0xff]
    %v878 = vld [vmem:[#allocation19 + $0x60] sm:$0xff]
    %v879 = vld [vmem:[#allocation19 + $0x68] sm:$0xff]
    %v880 = vld [vmem:[#allocation19 + $0x70] sm:$0xff]
    %v881 = vld [vmem:[#allocation19 + $0x78] sm:$0xff]
    %v882 = vld [vmem:[#allocation19 + $0x80] sm:$0xff]
    %v883 = vld [vmem:[#allocation19 + $0x88] sm:$0xff]
    %v884 = vld [vmem:[#allocation19 + $0x90] sm:$0xff]
    %v885 = vld [vmem:[#allocation19 + $0x98] sm:$0xff]
    %v886 = vld [vmem:[#allocation19 + $0xa0] sm:$0xff]
    %v887 = vld [vmem:[#allocation19 + $0xa8] sm:$0xff]
    %v888 = vld [vmem:[#allocation19 + $0xb0] sm:$0xff]
    %v889 = vld [vmem:[#allocation19 + $0xb8] sm:$0xff]
    %v890 = vld [vmem:[#allocation19 + $0xc0] sm:$0xff]
    %v891 = vld [vmem:[#allocation19 + $0xc8] sm:$0xff]
    %v892 = vld [vmem:[#allocation19 + $0xd0] sm:$0xff]
    %v893 = vld [vmem:[#allocation19 + $0xd8] sm:$0xff]
    %v894 = vld [vmem:[#allocation19 + $0xe0] sm:$0xff]
    %v895 = vld [vmem:[#allocation19 + $0xe8] sm:$0xff]
    %v896 = vld [vmem:[#allocation19 + $0xf0] sm:$0xff]
    %v897 = vld [vmem:[#allocation19 + $0xf8] sm:$0xff]
    %v898 = vpack.c.bf16 %v864, %v862
    %v899 = vpack.c.bf16 %v865, %v863
    %v900 = vld [vmem:[#allocation20] sm:$0x3]
    %v902 = vlaneseq
    %v903 = vshrl.u32 %v902, 7
    %v904 = vsub.s32 0, %v903
    %v905 = vrot.slane %v900, %v904
    %v906 = vlaneseq
    %v907 = vshrl.u32 %v906, 7
    %v908 = vsub.s32 1, %v907
    %v909 = vrot.slane %v900, %v908
    %v944 = vunpack.c.l.b16 %v866
    %v945 = vunpack.c.h.b16 %v866
    %v946 = vunpack.c.l.b16 %v867
    %v947 = vunpack.c.h.b16 %v867
    %v948 = vunpack.c.l.b16 %v868
    %v949 = vunpack.c.h.b16 %v868
    %v950 = vunpack.c.l.b16 %v869
    %v951 = vunpack.c.h.b16 %v869
    %v952 = vunpack.c.l.b16 %v870
    %v953 = vunpack.c.h.b16 %v870
    %v954 = vunpack.c.l.b16 %v871
    %v955 = vunpack.c.h.b16 %v871
    %v956 = vunpack.c.l.b16 %v872
    %v957 = vunpack.c.h.b16 %v872
    %v958 = vunpack.c.l.b16 %v873
    %v959 = vunpack.c.h.b16 %v873
    %v960 = vunpack.c.l.b16 %v874
    %v961 = vunpack.c.h.b16 %v874
    %v962 = vunpack.c.l.b16 %v875
    %v963 = vunpack.c.h.b16 %v875
    %v964 = vunpack.c.l.b16 %v876
    %v965 = vunpack.c.h.b16 %v876
    %v966 = vunpack.c.l.b16 %v877
    %v967 = vunpack.c.h.b16 %v877
    %v968 = vunpack.c.l.b16 %v878
    %v969 = vunpack.c.h.b16 %v878
    %v970 = vunpack.c.l.b16 %v879
    %v971 = vunpack.c.h.b16 %v879
    %v972 = vunpack.c.l.b16 %v880
    %v973 = vunpack.c.h.b16 %v880
    %v974 = vunpack.c.l.b16 %v881
    %v975 = vunpack.c.h.b16 %v881
    %v976 = vunpack.c.l.b16 %v882
    %v977 = vunpack.c.h.b16 %v882
    %v978 = vunpack.c.l.b16 %v883
    %v979 = vunpack.c.h.b16 %v883
    %v980 = vunpack.c.l.b16 %v884
    %v981 = vunpack.c.h.b16 %v884
    %v982 = vunpack.c.l.b16 %v885
    %v983 = vunpack.c.h.b16 %v885
    %v984 = vunpack.c.l.b16 %v886
    %v985 = vunpack.c.h.b16 %v886
    %v986 = vunpack.c.l.b16 %v887
    %v987 = vunpack.c.h.b16 %v887
    %v988 = vunpack.c.l.b16 %v888
    %v989 = vunpack.c.h.b16 %v888
    %v990 = vunpack.c.l.b16 %v889
    %v991 = vunpack.c.h.b16 %v889
    %v992 = vunpack.c.l.b16 %v890
    %v993 = vunpack.c.h.b16 %v890
    %v994 = vunpack.c.l.b16 %v891
    %v995 = vunpack.c.h.b16 %v891
    %v996 = vunpack.c.l.b16 %v892
    %v997 = vunpack.c.h.b16 %v892
    %v998 = vunpack.c.l.b16 %v893
    %v999 = vunpack.c.h.b16 %v893
    %v1000 = vunpack.c.l.b16 %v894
    %v1001 = vunpack.c.h.b16 %v894
    %v1002 = vunpack.c.l.b16 %v895
    %v1003 = vunpack.c.h.b16 %v895
    %v1004 = vunpack.c.l.b16 %v896
    %v1005 = vunpack.c.h.b16 %v896
    %v1006 = vunpack.c.l.b16 %v897
    %v1007 = vunpack.c.h.b16 %v897
    %v1008 = vpack.c.b16 %v946, %v944
    %v1009 = vpack.c.b16 %v947, %v945
    %v1010 = vpack.c.b16 %v950, %v948
    %v1011 = vpack.c.b16 %v951, %v949
    %v1012 = vpack.c.b16 %v954, %v952
    %v1013 = vpack.c.b16 %v955, %v953
    %v1014 = vpack.c.b16 %v958, %v956
    %v1015 = vpack.c.b16 %v959, %v957
    %v1016 = vpack.c.b16 %v962, %v960
    %v1017 = vpack.c.b16 %v963, %v961
    %v1018 = vpack.c.b16 %v966, %v964
    %v1019 = vpack.c.b16 %v967, %v965
    %v1020 = vpack.c.b16 %v970, %v968
    %v1021 = vpack.c.b16 %v971, %v969
    %v1022 = vpack.c.b16 %v974, %v972
    %v1023 = vpack.c.b16 %v975, %v973
    %v1024 = vpack.c.b16 %v978, %v976
    %v1025 = vpack.c.b16 %v979, %v977
    %v1026 = vpack.c.b16 %v982, %v980
    %v1027 = vpack.c.b16 %v983, %v981
    %v1028 = vpack.c.b16 %v986, %v984
    %v1029 = vpack.c.b16 %v987, %v985
    %v1030 = vpack.c.b16 %v990, %v988
    %v1031 = vpack.c.b16 %v991, %v989
    %v1032 = vpack.c.b16 %v994, %v992
    %v1033 = vpack.c.b16 %v995, %v993
    %v1034 = vpack.c.b16 %v998, %v996
    %v1035 = vpack.c.b16 %v999, %v997
    %v1036 = vpack.c.b16 %v1002, %v1000
    %v1037 = vpack.c.b16 %v1003, %v1001
    %v1038 = vpack.c.b16 %v1006, %v1004
    %v1039 = vpack.c.b16 %v1007, %v1005
    %1072 = vmatprep.subr.bf16.mxu0 %v1023
    %1073 = vmatpush1.bf16.msra.mxu0 %v1022
    %1074 = vmatprep.subr.bf16.mxu0 %v1021
    %1075 = vmatpush1.bf16.msra.mxu0 %v1020
    %1076 = vmatprep.subr.bf16.mxu0 %v1019
    %1077 = vmatpush1.bf16.msra.mxu0 %v1018
    %1078 = vmatprep.subr.bf16.mxu0 %v1017
    %1079 = vmatpush1.bf16.msra.mxu0 %v1016
    %1080 = vmatprep.subr.bf16.mxu0 %v1015
    %1081 = vmatpush1.bf16.msra.mxu0 %v1014
    %1082 = vmatprep.subr.bf16.mxu0 %v1013
    %1083 = vmatpush1.bf16.msra.mxu0 %v1012
    %1084 = vmatprep.subr.bf16.mxu0 %v1011
    %1085 = vmatpush1.bf16.msra.mxu0 %v1010
    %1086 = vmatprep.subr.bf16.mxu0 %v1009
    %1087 = vmatpush1.bf16.msra.mxu0 %v1008
    %1088 = vmatprep.subr.bf16.mxu0 %v1039
    %1089 = vmatpush2.bf16.msra.mxu0 %v1038
    %1090 = vmatprep.subr.bf16.mxu0 %v1037
    %1091 = vmatpush2.bf16.msra.mxu0 %v1036
    %1092 = vmatprep.subr.bf16.mxu0 %v1035
    %1093 = vmatpush2.bf16.msra.mxu0 %v1034
    %1094 = vmatprep.subr.bf16.mxu0 %v1033
    %1095 = vmatpush2.bf16.msra.mxu0 %v1032
    %1096 = vmatprep.subr.bf16.mxu0 %v1031
    %1097 = vmatpush2.bf16.msra.mxu0 %v1030
    %1098 = vmatprep.subr.bf16.mxu0 %v1029
    %1099 = vmatpush2.bf16.msra.mxu0 %v1028
    %1100 = vmatprep.subr.bf16.mxu0 %v1027
    %1101 = vmatpush2.bf16.msra.mxu0 %v1026
    %1102 = vmatprep.subr.bf16.mxu0 %v1025
    %1103 = vmatpush2.bf16.msra.mxu0 %v1024
    %1104 = vmatprep.mubr.bf16.mxu0 %v899
    %1105 = vmatmul.mubr.bf16.gmra.mxu0 %v898
    %v1106 = vpop.f32.mrf.mxu0
    %v1107 = vadd.f32 %v905, %v1106
    %v1108 = vpop.f32.mrf.mxu0
    %v1109 = vadd.f32 %v909, %v1108
    %v1110 = vpop.f32.mrf.mxu0
    %v1111 = vadd.f32 %v905, %v1110
    %v1112 = vpop.f32.mrf.mxu0
    %v1113 = vadd.f32 %v909, %v1112
    %1114 = vdwg.mxu0
    %v1115 = vmax.f32 %v1107, 0.0
    %v1116 = vmax.f32 %v1109, 0.0
    %v1117 = vmax.f32 %v1111, 0.0
    %v1118 = vmax.f32 %v1113, 0.0
    %v1119 = vld [vmem:[%s14] sm:$0xff]
    %v1120 = vld [vmem:[%s14 + $0x8] sm:$0xff]
    %v1121 = vld [vmem:[%s14 + $0x10] sm:$0xff]
    %v1122 = vld [vmem:[%s14 + $0x18] sm:$0xff]
    %v1123 = vld [vmem:[%s14 + $0x20] sm:$0xff]
    %v1124 = vld [vmem:[%s14 + $0x28] sm:$0xff]
    %v1125 = vld [vmem:[%s14 + $0x30] sm:$0xff]
    %v1126 = vld [vmem:[%s14 + $0x38] sm:$0xff]
    %v1127 = vld [vmem:[%s14 + $0x40] sm:$0xff]
    %v1128 = vld [vmem:[%s14 + $0x48] sm:$0xff]
    %v1129 = vld [vmem:[%s14 + $0x50] sm:$0xff]
    %v1130 = vld [vmem:[%s14 + $0x58] sm:$0xff]
    %v1131 = vld [vmem:[%s14 + $0x60] sm:$0xff]
    %v1132 = vld [vmem:[%s14 + $0x68] sm:$0xff]
    %v1133 = vld [vmem:[%s14 + $0x70] sm:$0xff]
    %v1134 = vld [vmem:[%s14 + $0x78] sm:$0xff]
    %v1135 = vld [vmem:[%s14 + $0x80] sm:$0xff]
    %v1136 = vld [vmem:[%s14 + $0x88] sm:$0xff]
    %v1137 = vld [vmem:[%s14 + $0x90] sm:$0xff]
    %v1138 = vld [vmem:[%s14 + $0x98] sm:$0xff]
    %v1139 = vld [vmem:[%s14 + $0xa0] sm:$0xff]
    %v1140 = vld [vmem:[%s14 + $0xa8] sm:$0xff]
    %v1141 = vld [vmem:[%s14 + $0xb0] sm:$0xff]
    %v1142 = vld [vmem:[%s14 + $0xb8] sm:$0xff]
    %v1143 = vld [vmem:[%s14 + $0xc0] sm:$0xff]
    %v1144 = vld [vmem:[%s14 + $0xc8] sm:$0xff]
    %v1145 = vld [vmem:[%s14 + $0xd0] sm:$0xff]
    %v1146 = vld [vmem:[%s14 + $0xd8] sm:$0xff]
    %v1147 = vld [vmem:[%s14 + $0xe0] sm:$0xff]
    %v1148 = vld [vmem:[%s14 + $0xe8] sm:$0xff]
    %v1149 = vld [vmem:[%s14 + $0xf0] sm:$0xff]
    %v1150 = vld [vmem:[%s14 + $0xf8] sm:$0xff]
    %v1151 = vld [vmem:[#allocation22] sm:$0x1]
    %v1153 = vlaneseq
    %v1154 = vshrl.u32 %v1153, 7
    %v1155 = vsub.s32 0, %v1154
    %v1156 = vrot.slane %v1151, %v1155
    %1158 = vmatprep.subr.mxu0 0.0
    %1159 = vmatpush1.msra.mxu0 %v1134
    %1160 = vmatprep.subr.mxu0 0.0
    %1161 = vmatpush1.msra.mxu0 %v1133
    %1162 = vmatprep.subr.mxu0 0.0
    %1163 = vmatpush1.msra.mxu0 %v1132
    %1164 = vmatprep.subr.mxu0 0.0
    %1165 = vmatpush1.msra.mxu0 %v1131
    %1166 = vmatprep.subr.mxu0 0.0
    %1167 = vmatpush1.msra.mxu0 %v1130
    %1168 = vmatprep.subr.mxu0 0.0
    %1169 = vmatpush1.msra.mxu0 %v1129
    %1170 = vmatprep.subr.mxu0 0.0
    %1171 = vmatpush1.msra.mxu0 %v1128
    %1172 = vmatprep.subr.mxu0 0.0
    %1173 = vmatpush1.msra.mxu0 %v1127
    %1174 = vmatprep.subr.mxu0 0.0
    %1175 = vmatpush1.msra.mxu0 %v1126
    %1176 = vmatprep.subr.mxu0 0.0
    %1177 = vmatpush1.msra.mxu0 %v1125
    %1178 = vmatprep.subr.mxu0 0.0
    %1179 = vmatpush1.msra.mxu0 %v1124
    %1180 = vmatprep.subr.mxu0 0.0
    %1181 = vmatpush1.msra.mxu0 %v1123
    %1182 = vmatprep.subr.mxu0 0.0
    %1183 = vmatpush1.msra.mxu0 %v1122
    %1184 = vmatprep.subr.mxu0 0.0
    %1185 = vmatpush1.msra.mxu0 %v1121
    %1186 = vmatprep.subr.mxu0 0.0
    %1187 = vmatpush1.msra.mxu0 %v1120
    %1188 = vmatprep.subr.mxu0 0.0
    %1189 = vmatpush1.msra.mxu0 %v1119
    %1190 = vmatprep.subr.mxu0 0.0
    %1191 = vmatpush2.msra.mxu0 %v1150
    %1192 = vmatprep.subr.mxu0 0.0
    %1193 = vmatpush2.msra.mxu0 %v1149
    %1194 = vmatprep.subr.mxu0 0.0
    %1195 = vmatpush2.msra.mxu0 %v1148
    %1196 = vmatprep.subr.mxu0 0.0
    %1197 = vmatpush2.msra.mxu0 %v1147
    %1198 = vmatprep.subr.mxu0 0.0
    %1199 = vmatpush2.msra.mxu0 %v1146
    %1200 = vmatprep.subr.mxu0 0.0
    %1201 = vmatpush2.msra.mxu0 %v1145
    %1202 = vmatprep.subr.mxu0 0.0
    %1203 = vmatpush2.msra.mxu0 %v1144
    %1204 = vmatprep.subr.mxu0 0.0
    %1205 = vmatpush2.msra.mxu0 %v1143
    %1206 = vmatprep.subr.mxu0 0.0
    %1207 = vmatpush2.msra.mxu0 %v1142
    %1208 = vmatprep.subr.mxu0 0.0
    %1209 = vmatpush2.msra.mxu0 %v1141
    %1210 = vmatprep.subr.mxu0 0.0
    %1211 = vmatpush2.msra.mxu0 %v1140
    %1212 = vmatprep.subr.mxu0 0.0
    %1213 = vmatpush2.msra.mxu0 %v1139
    %1214 = vmatprep.subr.mxu0 0.0
    %1215 = vmatpush2.msra.mxu0 %v1138
    %1216 = vmatprep.subr.mxu0 0.0
    %1217 = vmatpush2.msra.mxu0 %v1137
    %1218 = vmatprep.subr.mxu0 0.0
    %1219 = vmatpush2.msra.mxu0 %v1136
    %1220 = vmatprep.subr.mxu0 0.0
    %1221 = vmatpush2.msra.mxu0 %v1135
    %1222 = vmatprep.mubr.f32.mxu0 %v1116
    %1223 = vmatmul.mubr.f32.gmra.mxu0 %v1115
    %v1224 = vpop.f32.mrf.mxu0
    %v1225 = vadd.f32 %v1156, %v1224
    %v1226 = vpop.f32.mrf.mxu0
    %1227 = vmatprep.mubr.f32.mxu0 %v1118
    %1228 = vmatmul.mubr.f32.gmra.mxu0 %v1117
    %v1229 = vpop.f32.mrf.mxu0
    %v1230 = vadd.f32 %v1156, %v1229
    %v1231 = vpop.f32.mrf.mxu0
    %1232 = vdwg.mxu0
    %vm1233 = vcmask 105472
    %1234 = vst.msk [vmem:[#allocation28] sm:$0xff] %vm1233, %v1225
    %1235 = vst.msk [vmem:[#allocation28 + $0x8] sm:$0xff] %vm1233, %v1230
    %v1236 = vld [vmem:[#allocation23] sm:$0xff]
    %v1237 = vld [vmem:[#allocation23 + $0x8] sm:$0x77]
    %v1238 = vpack.c.bf16 %v1230, %v1225
    %v1239 = vld [vmem:[#allocation25] sm:$0x3]
    %v1241 = vlaneseq
    %v1242 = vshrl.u32 %v1241, 7
    %v1243 = vsub.s32 0, %v1242
    %v1244 = vrot.slane %v1239, %v1243
    %v1245 = vlaneseq
    %v1246 = vshrl.u32 %v1245, 7
    %v1247 = vsub.s32 1, %v1246
    %v1248 = vrot.slane %v1239, %v1247
    %v1253 = vunpack.c.l.b16 %v1236
    %v1254 = vunpack.c.h.b16 %v1236
    %v1255 = vunpack.c.l.b16 %v1237
    %v1256 = vunpack.c.h.b16 %v1237
    %v1257 = vpack.c.b16 %v1255, %v1253
    %v1258 = vpack.c.b16 %v1256, %v1254
    %v1260 = vsel %vm1233, %v1238, 0
    %vm1262 = vcmask 1045504
    %vm1263 = vcmask 1046528
    %v1264 = vsel %vm1262, 4294967295, 65535
    %v1265 = vsel %vm1263, %v1264, 0
    %v1267 = vand.u32 %v1257, %v1265
    %v1270 = vand.u32 %v1258, %v1265
    %1272 = vmatprep.subr.bf16.mxu0 0
    %1273 = vmatpush1.bf16.msra.mxu0 0
    %1274 = vmatprep.subr.bf16.mxu0 0
    %1275 = vmatpush1.bf16.msra.mxu0 0
    %1276 = vmatprep.subr.bf16.mxu0 0
    %1277 = vmatpush1.bf16.msra.mxu0 0
    %1278 = vmatprep.subr.bf16.mxu0 0
    %1279 = vmatpush1.bf16.msra.mxu0 0
    %1280 = vmatprep.subr.bf16.mxu0 0
    %1281 = vmatpush1.bf16.msra.mxu0 0
    %1282 = vmatprep.subr.bf16.mxu0 0
    %1283 = vmatpush1.bf16.msra.mxu0 0
    %1284 = vmatprep.subr.bf16.mxu0 0
    %1285 = vmatpush1.bf16.msra.mxu0 0
    %1286 = vmatprep.subr.bf16.mxu0 %v1270
    %1287 = vmatpush1.bf16.msra.mxu0 %v1267
    %1288 = vmatprep.subr.bf16.mxu0 0
    %1289 = vmatpush2.bf16.msra.mxu0 0
    %1290 = vmatprep.subr.bf16.mxu0 0
    %1291 = vmatpush2.bf16.msra.mxu0 0
    %1292 = vmatprep.subr.bf16.mxu0 0
    %1293 = vmatpush2.bf16.msra.mxu0 0
    %1294 = vmatprep.subr.bf16.mxu0 0
    %1295 = vmatpush2.bf16.msra.mxu0 0
    %1296 = vmatprep.subr.bf16.mxu0 0
    %1297 = vmatpush2.bf16.msra.mxu0 0
    %1298 = vmatprep.subr.bf16.mxu0 0
    %1299 = vmatpush2.bf16.msra.mxu0 0
    %1300 = vmatprep.subr.bf16.mxu0 0
    %1301 = vmatpush2.bf16.msra.mxu0 0
    %1302 = vmatprep.subr.bf16.mxu0 0
    %1303 = vmatpush2.bf16.msra.mxu0 0
    %1304 = vmatprep.mubr.bf16.mxu0 0
    %1305 = vmatmul.mubr.bf16.gmra.mxu0 %v1260
    %v1306 = vpop.f32.mrf.mxu0
    %v1307 = vadd.f32 %v1244, %v1306
    %v1308 = vpop.f32.mrf.mxu0
    %v1309 = vadd.f32 %v1248, %v1308
    %v1310 = vpop.f32.mrf.mxu0
    %v1311 = vadd.f32 %v1244, %v1310
    %v1312 = vpop.f32.mrf.mxu0
    %v1313 = vadd.f32 %v1248, %v1312
    %1314 = vdwg.mxu0
    %v1315 = vmax.f32 %v1307, 0.0
    %v1316 = vmax.f32 %v1309, 0.0
    %v1317 = vmax.f32 %v1311, 0.0
    %v1318 = vmax.f32 %v1313, 0.0
    %v1319 = vld [vmem:[%s18] sm:$0xff]
    %v1320 = vld [vmem:[%s18 + $0x8] sm:$0xff]
    %v1321 = vld [vmem:[%s18 + $0x10] sm:$0xff]
    %v1322 = vld [vmem:[%s18 + $0x18] sm:$0xff]
    %v1323 = vld [vmem:[%s18 + $0x20] sm:$0xff]
    %v1324 = vld [vmem:[%s18 + $0x28] sm:$0xff]
    %v1325 = vld [vmem:[%s18 + $0x30] sm:$0xff]
    %v1326 = vld [vmem:[%s18 + $0x38] sm:$0xff]
    %v1327 = vld [vmem:[%s18 + $0x40] sm:$0xff]
    %v1328 = vld [vmem:[%s18 + $0x48] sm:$0xff]
    %v1329 = vld [vmem:[%s18 + $0x50] sm:$0xff]
    %v1330 = vld [vmem:[%s18 + $0x58] sm:$0xff]
    %v1331 = vld [vmem:[%s18 + $0x60] sm:$0xff]
    %v1332 = vld [vmem:[%s18 + $0x68] sm:$0xff]
    %v1333 = vld [vmem:[%s18 + $0x70] sm:$0xff]
    %v1334 = vld [vmem:[%s18 + $0x78] sm:$0xff]
    %v1335 = vld [vmem:[%s18 + $0x80] sm:$0xff]
    %v1336 = vld [vmem:[%s18 + $0x88] sm:$0xff]
    %v1337 = vld [vmem:[%s18 + $0x90] sm:$0xff]
    %v1338 = vld [vmem:[%s18 + $0x98] sm:$0xff]
    %v1339 = vld [vmem:[%s18 + $0xa0] sm:$0xff]
    %v1340 = vld [vmem:[%s18 + $0xa8] sm:$0xff]
    %v1341 = vld [vmem:[%s18 + $0xb0] sm:$0xff]
    %v1342 = vld [vmem:[%s18 + $0xb8] sm:$0xff]
    %v1343 = vld [vmem:[%s18 + $0xc0] sm:$0xff]
    %v1344 = vld [vmem:[%s18 + $0xc8] sm:$0xff]
    %v1345 = vld [vmem:[%s18 + $0xd0] sm:$0xff]
    %v1346 = vld [vmem:[%s18 + $0xd8] sm:$0xff]
    %v1347 = vld [vmem:[%s18 + $0xe0] sm:$0xff]
    %v1348 = vld [vmem:[%s18 + $0xe8] sm:$0xff]
    %v1349 = vld [vmem:[%s18 + $0xf0] sm:$0xff]
    %v1350 = vld [vmem:[%s18 + $0xf8] sm:$0xff]
    %v1351 = vpack.c.bf16 %v1317, %v1315
    %v1352 = vpack.c.bf16 %v1318, %v1316
    %v1353 = vld [vmem:[#allocation26] sm:$0x3]
    %v1355 = vlaneseq
    %v1356 = vshrl.u32 %v1355, 7
    %v1357 = vsub.s32 0, %v1356
    %v1358 = vrot.slane %v1353, %v1357
    %v1359 = vlaneseq
    %v1360 = vshrl.u32 %v1359, 7
    %v1361 = vsub.s32 1, %v1360
    %v1362 = vrot.slane %v1353, %v1361
    %v1397 = vunpack.c.l.b16 %v1319
    %v1398 = vunpack.c.h.b16 %v1319
    %v1399 = vunpack.c.l.b16 %v1320
    %v1400 = vunpack.c.h.b16 %v1320
    %v1401 = vunpack.c.l.b16 %v1321
    %v1402 = vunpack.c.h.b16 %v1321
    %v1403 = vunpack.c.l.b16 %v1322
    %v1404 = vunpack.c.h.b16 %v1322
    %v1405 = vunpack.c.l.b16 %v1323
    %v1406 = vunpack.c.h.b16 %v1323
    %v1407 = vunpack.c.l.b16 %v1324
    %v1408 = vunpack.c.h.b16 %v1324
    %v1409 = vunpack.c.l.b16 %v1325
    %v1410 = vunpack.c.h.b16 %v1325
    %v1411 = vunpack.c.l.b16 %v1326
    %v1412 = vunpack.c.h.b16 %v1326
    %v1413 = vunpack.c.l.b16 %v1327
    %v1414 = vunpack.c.h.b16 %v1327
    %v1415 = vunpack.c.l.b16 %v1328
    %v1416 = vunpack.c.h.b16 %v1328
    %v1417 = vunpack.c.l.b16 %v1329
    %v1418 = vunpack.c.h.b16 %v1329
    %v1419 = vunpack.c.l.b16 %v1330
    %v1420 = vunpack.c.h.b16 %v1330
    %v1421 = vunpack.c.l.b16 %v1331
    %v1422 = vunpack.c.h.b16 %v1331
    %v1423 = vunpack.c.l.b16 %v1332
    %v1424 = vunpack.c.h.b16 %v1332
    %v1425 = vunpack.c.l.b16 %v1333
    %v1426 = vunpack.c.h.b16 %v1333
    %v1427 = vunpack.c.l.b16 %v1334
    %v1428 = vunpack.c.h.b16 %v1334
    %v1429 = vunpack.c.l.b16 %v1335
    %v1430 = vunpack.c.h.b16 %v1335
    %v1431 = vunpack.c.l.b16 %v1336
    %v1432 = vunpack.c.h.b16 %v1336
    %v1433 = vunpack.c.l.b16 %v1337
    %v1434 = vunpack.c.h.b16 %v1337
    %v1435 = vunpack.c.l.b16 %v1338
    %v1436 = vunpack.c.h.b16 %v1338
    %v1437 = vunpack.c.l.b16 %v1339
    %v1438 = vunpack.c.h.b16 %v1339
    %v1439 = vunpack.c.l.b16 %v1340
    %v1440 = vunpack.c.h.b16 %v1340
    %v1441 = vunpack.c.l.b16 %v1341
    %v1442 = vunpack.c.h.b16 %v1341
    %v1443 = vunpack.c.l.b16 %v1342
    %v1444 = vunpack.c.h.b16 %v1342
    %v1445 = vunpack.c.l.b16 %v1343
    %v1446 = vunpack.c.h.b16 %v1343
    %v1447 = vunpack.c.l.b16 %v1344
    %v1448 = vunpack.c.h.b16 %v1344
    %v1449 = vunpack.c.l.b16 %v1345
    %v1450 = vunpack.c.h.b16 %v1345
    %v1451 = vunpack.c.l.b16 %v1346
    %v1452 = vunpack.c.h.b16 %v1346
    %v1453 = vunpack.c.l.b16 %v1347
    %v1454 = vunpack.c.h.b16 %v1347
    %v1455 = vunpack.c.l.b16 %v1348
    %v1456 = vunpack.c.h.b16 %v1348
    %v1457 = vunpack.c.l.b16 %v1349
    %v1458 = vunpack.c.h.b16 %v1349
    %v1459 = vunpack.c.l.b16 %v1350
    %v1460 = vunpack.c.h.b16 %v1350
    %v1461 = vpack.c.b16 %v1399, %v1397
    %v1462 = vpack.c.b16 %v1400, %v1398
    %v1463 = vpack.c.b16 %v1403, %v1401
    %v1464 = vpack.c.b16 %v1404, %v1402
    %v1465 = vpack.c.b16 %v1407, %v1405
    %v1466 = vpack.c.b16 %v1408, %v1406
    %v1467 = vpack.c.b16 %v1411, %v1409
    %v1468 = vpack.c.b16 %v1412, %v1410
    %v1469 = vpack.c.b16 %v1415, %v1413
    %v1470 = vpack.c.b16 %v1416, %v1414
    %v1471 = vpack.c.b16 %v1419, %v1417
    %v1472 = vpack.c.b16 %v1420, %v1418
    %v1473 = vpack.c.b16 %v1423, %v1421
    %v1474 = vpack.c.b16 %v1424, %v1422
    %v1475 = vpack.c.b16 %v1427, %v1425
    %v1476 = vpack.c.b16 %v1428, %v1426
    %v1477 = vpack.c.b16 %v1431, %v1429
    %v1478 = vpack.c.b16 %v1432, %v1430
    %v1479 = vpack.c.b16 %v1435, %v1433
    %v1480 = vpack.c.b16 %v1436, %v1434
    %v1481 = vpack.c.b16 %v1439, %v1437
    %v1482 = vpack.c.b16 %v1440, %v1438
    %v1483 = vpack.c.b16 %v1443, %v1441
    %v1484 = vpack.c.b16 %v1444, %v1442
    %v1485 = vpack.c.b16 %v1447, %v1445
    %v1486 = vpack.c.b16 %v1448, %v1446
    %v1487 = vpack.c.b16 %v1451, %v1449
    %v1488 = vpack.c.b16 %v1452, %v1450
    %v1489 = vpack.c.b16 %v1455, %v1453
    %v1490 = vpack.c.b16 %v1456, %v1454
    %v1491 = vpack.c.b16 %v1459, %v1457
    %v1492 = vpack.c.b16 %v1460, %v1458
    %1525 = vmatprep.subr.bf16.mxu0 %v1476
    %1526 = vmatpush1.bf16.msra.mxu0 %v1475
    %1527 = vmatprep.subr.bf16.mxu0 %v1474
    %1528 = vmatpush1.bf16.msra.mxu0 %v1473
    %1529 = vmatprep.subr.bf16.mxu0 %v1472
    %1530 = vmatpush1.bf16.msra.mxu0 %v1471
    %1531 = vmatprep.subr.bf16.mxu0 %v1470
    %1532 = vmatpush1.bf16.msra.mxu0 %v1469
    %1533 = vmatprep.subr.bf16.mxu0 %v1468
    %1534 = vmatpush1.bf16.msra.mxu0 %v1467
    %1535 = vmatprep.subr.bf16.mxu0 %v1466
    %1536 = vmatpush1.bf16.msra.mxu0 %v1465
    %1537 = vmatprep.subr.bf16.mxu0 %v1464
    %1538 = vmatpush1.bf16.msra.mxu0 %v1463
    %1539 = vmatprep.subr.bf16.mxu0 %v1462
    %1540 = vmatpush1.bf16.msra.mxu0 %v1461
    %1541 = vmatprep.subr.bf16.mxu0 %v1492
    %1542 = vmatpush2.bf16.msra.mxu0 %v1491
    %1543 = vmatprep.subr.bf16.mxu0 %v1490
    %1544 = vmatpush2.bf16.msra.mxu0 %v1489
    %1545 = vmatprep.subr.bf16.mxu0 %v1488
    %1546 = vmatpush2.bf16.msra.mxu0 %v1487
    %1547 = vmatprep.subr.bf16.mxu0 %v1486
    %1548 = vmatpush2.bf16.msra.mxu0 %v1485
    %1549 = vmatprep.subr.bf16.mxu0 %v1484
    %1550 = vmatpush2.bf16.msra.mxu0 %v1483
    %1551 = vmatprep.subr.bf16.mxu0 %v1482
    %1552 = vmatpush2.bf16.msra.mxu0 %v1481
    %1553 = vmatprep.subr.bf16.mxu0 %v1480
    %1554 = vmatpush2.bf16.msra.mxu0 %v1479
    %1555 = vmatprep.subr.bf16.mxu0 %v1478
    %1556 = vmatpush2.bf16.msra.mxu0 %v1477
    %1557 = vmatprep.mubr.bf16.mxu0 %v1352
    %1558 = vmatmul.mubr.bf16.gmra.mxu0 %v1351
    %v1559 = vpop.f32.mrf.mxu0
    %v1560 = vadd.f32 %v1358, %v1559
    %v1561 = vpop.f32.mrf.mxu0
    %v1562 = vadd.f32 %v1362, %v1561
    %v1563 = vpop.f32.mrf.mxu0
    %v1564 = vadd.f32 %v1358, %v1563
    %v1565 = vpop.f32.mrf.mxu0
    %v1566 = vadd.f32 %v1362, %v1565
    %1567 = vdwg.mxu0
    %v1568 = vmax.f32 %v1560, 0.0
    %v1569 = vmax.f32 %v1562, 0.0
    %v1570 = vmax.f32 %v1564, 0.0
    %v1571 = vmax.f32 %v1566, 0.0
    %v1572 = vld [vmem:[%s20] sm:$0xf]
    %v1573 = vld [vmem:[%s20 + $0x4] sm:$0xf]
    %v1574 = vld [vmem:[%s20 + $0x8] sm:$0xf]
    %v1575 = vld [vmem:[%s20 + $0xc] sm:$0xf]
    %v1576 = vld [vmem:[%s20 + $0x10] sm:$0xf]
    %v1577 = vld [vmem:[%s20 + $0x14] sm:$0xf]
    %v1578 = vld [vmem:[%s20 + $0x18] sm:$0xf]
    %v1579 = vld [vmem:[%s20 + $0x1c] sm:$0xf]
    %v1580 = vld [vmem:[%s20 + $0x20] sm:$0xf]
    %v1581 = vld [vmem:[%s20 + $0x24] sm:$0xf]
    %v1582 = vld [vmem:[%s20 + $0x28] sm:$0xf]
    %v1583 = vld [vmem:[%s20 + $0x2c] sm:$0xf]
    %v1584 = vld [vmem:[%s20 + $0x30] sm:$0xf]
    %v1585 = vld [vmem:[%s20 + $0x34] sm:$0xf]
    %v1586 = vld [vmem:[%s20 + $0x38] sm:$0xf]
    %v1587 = vld [vmem:[%s20 + $0x3c] sm:$0xf]
    %v1588 = vld [vmem:[%s20 + $0x40] sm:$0xf]
    %v1589 = vld [vmem:[%s20 + $0x44] sm:$0xf]
    %v1590 = vld [vmem:[%s20 + $0x48] sm:$0xf]
    %v1591 = vld [vmem:[%s20 + $0x4c] sm:$0xf]
    %v1592 = vld [vmem:[%s20 + $0x50] sm:$0xf]
    %v1593 = vld [vmem:[%s20 + $0x54] sm:$0xf]
    %v1594 = vld [vmem:[%s20 + $0x58] sm:$0xf]
    %v1595 = vld [vmem:[%s20 + $0x5c] sm:$0xf]
    %v1596 = vld [vmem:[%s20 + $0x60] sm:$0xf]
    %v1597 = vld [vmem:[%s20 + $0x64] sm:$0xf]
    %v1598 = vld [vmem:[%s20 + $0x68] sm:$0xf]
    %v1599 = vld [vmem:[%s20 + $0x6c] sm:$0xf]
    %v1600 = vld [vmem:[%s20 + $0x70] sm:$0xf]
    %v1601 = vld [vmem:[%s20 + $0x74] sm:$0xf]
    %v1602 = vld [vmem:[%s20 + $0x78] sm:$0xf]
    %v1603 = vld [vmem:[%s20 + $0x7c] sm:$0xf]
    %v1604 = vpack.c.bf16 %v1570, %v1568
    %v1605 = vpack.c.bf16 %v1571, %v1569
    %v1606 = vld [vmem:[%s21] sm:$0x1]
    %v1608 = vlaneseq
    %v1609 = vshrl.u32 %v1608, 7
    %v1610 = vsub.s32 0, %v1609
    %v1611 = vrot.slane %v1606, %v1610
    %v1645 = vunpack.c.l.b16 %v1572
    %v1646 = vunpack.c.l.b16 %v1573
    %v1647 = vunpack.c.l.b16 %v1574
    %v1648 = vunpack.c.l.b16 %v1575
    %v1649 = vunpack.c.l.b16 %v1576
    %v1650 = vunpack.c.l.b16 %v1577
    %v1651 = vunpack.c.l.b16 %v1578
    %v1652 = vunpack.c.l.b16 %v1579
    %v1653 = vunpack.c.l.b16 %v1580
    %v1654 = vunpack.c.l.b16 %v1581
    %v1655 = vunpack.c.l.b16 %v1582
    %v1656 = vunpack.c.l.b16 %v1583
    %v1657 = vunpack.c.l.b16 %v1584
    %v1658 = vunpack.c.l.b16 %v1585
    %v1659 = vunpack.c.l.b16 %v1586
    %v1660 = vunpack.c.l.b16 %v1587
    %v1661 = vunpack.c.l.b16 %v1588
    %v1662 = vunpack.c.l.b16 %v1589
    %v1663 = vunpack.c.l.b16 %v1590
    %v1664 = vunpack.c.l.b16 %v1591
    %v1665 = vunpack.c.l.b16 %v1592
    %v1666 = vunpack.c.l.b16 %v1593
    %v1667 = vunpack.c.l.b16 %v1594
    %v1668 = vunpack.c.l.b16 %v1595
    %v1669 = vunpack.c.l.b16 %v1596
    %v1670 = vunpack.c.l.b16 %v1597
    %v1671 = vunpack.c.l.b16 %v1598
    %v1672 = vunpack.c.l.b16 %v1599
    %v1673 = vunpack.c.l.b16 %v1600
    %v1674 = vunpack.c.l.b16 %v1601
    %v1675 = vunpack.c.l.b16 %v1602
    %v1676 = vunpack.c.l.b16 %v1603
    %v1677 = vpack.c.b16 %v1646, %v1645
    %v1678 = vpack.c.b16 %v1648, %v1647
    %v1679 = vpack.c.b16 %v1650, %v1649
    %v1680 = vpack.c.b16 %v1652, %v1651
    %v1681 = vpack.c.b16 %v1654, %v1653
    %v1682 = vpack.c.b16 %v1656, %v1655
    %v1683 = vpack.c.b16 %v1658, %v1657
    %v1684 = vpack.c.b16 %v1660, %v1659
    %v1685 = vpack.c.b16 %v1662, %v1661
    %v1686 = vpack.c.b16 %v1664, %v1663
    %v1687 = vpack.c.b16 %v1666, %v1665
    %v1688 = vpack.c.b16 %v1668, %v1667
    %v1689 = vpack.c.b16 %v1670, %v1669
    %v1690 = vpack.c.b16 %v1672, %v1671
    %v1691 = vpack.c.b16 %v1674, %v1673
    %v1692 = vpack.c.b16 %v1676, %v1675
    %1709 = vmatprep.subr.bf16.mxu0 0
    %1710 = vmatpush1.bf16.msra.mxu0 %v1684
    %1711 = vmatprep.subr.bf16.mxu0 0
    %1712 = vmatpush1.bf16.msra.mxu0 %v1683
    %1713 = vmatprep.subr.bf16.mxu0 0
    %1714 = vmatpush1.bf16.msra.mxu0 %v1682
    %1715 = vmatprep.subr.bf16.mxu0 0
    %1716 = vmatpush1.bf16.msra.mxu0 %v1681
    %1717 = vmatprep.subr.bf16.mxu0 0
    %1718 = vmatpush1.bf16.msra.mxu0 %v1680
    %1719 = vmatprep.subr.bf16.mxu0 0
    %1720 = vmatpush1.bf16.msra.mxu0 %v1679
    %1721 = vmatprep.subr.bf16.mxu0 0
    %1722 = vmatpush1.bf16.msra.mxu0 %v1678
    %1723 = vmatprep.subr.bf16.mxu0 0
    %1724 = vmatpush1.bf16.msra.mxu0 %v1677
    %1725 = vmatprep.subr.bf16.mxu0 0
    %1726 = vmatpush2.bf16.msra.mxu0 %v1692
    %1727 = vmatprep.subr.bf16.mxu0 0
    %1728 = vmatpush2.bf16.msra.mxu0 %v1691
    %1729 = vmatprep.subr.bf16.mxu0 0
    %1730 = vmatpush2.bf16.msra.mxu0 %v1690
    %1731 = vmatprep.subr.bf16.mxu0 0
    %1732 = vmatpush2.bf16.msra.mxu0 %v1689
    %1733 = vmatprep.subr.bf16.mxu0 0
    %1734 = vmatpush2.bf16.msra.mxu0 %v1688
    %1735 = vmatprep.subr.bf16.mxu0 0
    %1736 = vmatpush2.bf16.msra.mxu0 %v1687
    %1737 = vmatprep.subr.bf16.mxu0 0
    %1738 = vmatpush2.bf16.msra.mxu0 %v1686
    %1739 = vmatprep.subr.bf16.mxu0 0
    %1740 = vmatpush2.bf16.msra.mxu0 %v1685
    %1741 = vmatprep.mubr.bf16.mxu0 %v1605
    %1742 = vmatmul.mubr.bf16.gmra.mxu0 %v1604
    %v1743 = vpop.f32.mrf.mxu0
    %v1744 = vadd.f32 %v1611, %v1743
    %v1745 = vpop.f32.mrf.mxu0
    %v1746 = vpop.f32.mrf.mxu0
    %v1747 = vadd.f32 %v1611, %v1746
    %v1748 = vpop.f32.mrf.mxu0
    %1749 = vdwg.mxu0
    %vm1750 = vcmask 72704
    %v1751 = vsel %vm1750, %v1744, -inf
    %1752 = vmax.xlane.f32.xlu0 %v1751
    %v1753 = vpop.xlane.xlu0 %1752
    %v1754 = vsel %vm1750, %v1747, -inf
    %1755 = vmax.xlane.f32.xlu0 %v1754
    %v1756 = vpop.xlane.xlu0 %1755
    %v1757 = vsub.f32 %v1744, %v1753
    %v1758 = vsub.f32 %v1747, %v1756
    %v1759 = vmul.f32 %v1757, 1.442695
    %v1760 = vpow.pop %v1759
    %v1761 = vmul.f32 %v1758, 1.442695
    %v1762 = vpow.pop %v1761
    %v1763 = vsel %vm1750, %v1760, 0.0
    %1764 = vadd.xlane.f32.xlu0 %v1763
    %v1765 = vpop.xlane.xlu0 %1764
    %v1766 = vsel %vm1750, %v1762, 0.0
    %1767 = vadd.xlane.f32.xlu0 %v1766
    %v1768 = vpop.xlane.xlu0 %1767
    %v1769 = vlog2.pop %v1765
    %v1770 = vmul.f32 %v1769, 0.6931472
    %v1771 = vlog2.pop %v1768
    %v1772 = vmul.f32 %v1771, 0.6931472
    %v1773 = vsub.f32 %v1757, %v1770
    %v1774 = vsub.f32 %v1758, %v1772
    %1775 = vst.msk [vmem:[#allocation29] sm:$0xff] %vm1750, %v1773
    %1776 = vst.msk [vmem:[#allocation29 + $0x8] sm:$0xff] %vm1750, %v1774
    // Predicated region
    $region154: #{tpu_custom_call.1} parent=1 // pred_check
      _
    $region155: #{tpu_custom_call.1} parent=1 // pred_check_branch
      %1778 = sbr.rel (0) target = $region157
    $region156: #{tpu_custom_call.1} parent=1 // pred_region
      %s1780 = ssub.s32 256, 256
      %1781 = vsyncadd [#allocation4], %s1780
      %s1782 = sshll.u32 [#allocation28], 4
      %s1783 = int_to_ptr.vmem [resolvable:$true] %s1782
      %1788 = dma.vmem_to_hbm [thread:$0]  %s1783, 256, %s22, [#allocation4], 128, 128, 8
    $region157: #{tpu_custom_call.1} parent=1 // pred_fallthru
      _
    // Predicated region
    $region158: #{tpu_custom_call.1} parent=1 // pred_check
      _
    $region159: #{tpu_custom_call.1} parent=1 // pred_check_branch
      %1790 = sbr.rel (0) target = $region161
    $region160: #{tpu_custom_call.1} parent=1 // pred_region
      %s1792 = ssub.s32 256, 256
      %1793 = vsyncadd [#allocation30], %s1792
      %s1794 = sshll.u32 [#allocation29], 4
      %s1795 = int_to_ptr.vmem [resolvable:$true] %s1794
      %1800 = dma.vmem_to_hbm [thread:$0]  %s1795, 256, %s23, [#allocation30], 128, 128, 8
    $region161: #{tpu_custom_call.1} parent=1 // pred_fallthru
      _
    // Predicated region
    $region162: #{tpu_custom_call.1} parent=1 // pred_check
      _
    $region163: #{tpu_custom_call.1} parent=1 // pred_check_branch
      %1802 = sbr.rel (0) target = $region165
    $region164: #{tpu_custom_call.1} parent=1 // pred_region
      %1803 = dma.done [#allocation4], 256
    $region165: #{tpu_custom_call.1} parent=1 // pred_fallthru
      _
    // Predicated region
    $region166: #{tpu_custom_call.1} parent=1 // pred_check
      _
    $region167: #{tpu_custom_call.1} parent=1 // pred_check_branch
      %1805 = sbr.rel (0) target = $region169
    $region168: #{tpu_custom_call.1} parent=1 // pred_region
      %1806 = dma.done [#allocation30], 256
    $region169: #{tpu_custom_call.1} parent=1 // pred_fallthru
      _
    %1807 = vsyncpa [#allocation3], 1
    %1808 = vsyncpa [#allocation6], 1
    %1809 = vsyncpa [#allocation9], 1
    %1810 = vsyncpa [#allocation12], 1
    %1811 = vsyncpa [#allocation15], 1
    %1812 = vsyncpa [#allocation18], 1
    %1813 = vsyncpa [#allocation21], 1
    %1814 = vsyncpa [#allocation24], 1
    %1815 = vsyncpa [#allocation27], 1
    %1816 = vsyncpa [#allocation4], 1
    %1817 = vsyncpa [#allocation30], 1

</llo_original>
